<compile_context>
chip_gen: v6e
topology: v6e:2x2x1
jax: 0.10.0
libtpu: 0.0.40
codegen_flags: <defaults>
</compile_context>

<pallas_src>
import functools

import jax
import jax.numpy as jnp
from jax.experimental import pallas as pl
from jax.experimental.pallas import tpu as pltpu


def _layer_norm(y, gamma, beta, eps=1e-5):
    mu = jnp.mean(y, axis=-1, keepdims=True)
    var = jnp.mean((y - mu) ** 2, axis=-1, keepdims=True)
    return (y - mu) * jax.lax.rsqrt(var + eps) * gamma + beta


def encoder_layer_kernel(
    x_ref,            # (1, S, D)        f32
    wqkv_ref,         # (1, D, 3*BW)     bf16  fused per-block Q/K/V weights
    bqkv_ref,         # (1, 1, 3*BW)     f32
    wo_ref,           # (1, BW, D)       bf16  per-block rows of Wo
    bo_ref,           # (1, D)           f32
    g1_ref, be1_ref,  # (1, D)           f32   LayerNorm1
    w1c_ref,          # (NC, D, FC)      bf16  FFN in-proj, chunked over d_ff
    b1c_ref,          # (NC, 1, FC)      f32
    w2c_ref,          # (NC, FC, D)      bf16  FFN out-proj, chunked over d_ff
    b2_ref,           # (1, D)           f32
    g2_ref, be2_ref,  # (1, D)           f32   LayerNorm2
    o_ref,            # (1, S, D)
    attn_acc,         # (S, D)  f32 VMEM scratch (attn acc, then FFN acc)
    xbf_scr,          # (S, D)  bf16 VMEM scratch (x cast once per batch)
    *, heads_per_block, dh_pad,
):
    blk = pl.program_id(1)
    bw = heads_per_block * dh_pad

    @pl.when(blk == 0)
    def _():
        attn_acc[...] = jnp.zeros_like(attn_acc)
        xbf_scr[...] = x_ref[0].astype(jnp.bfloat16)   # cast once per batch

    x_bf = xbf_scr[...]

    # Fused Q/K/V projection for this head block: one (S,D)@(D,3*BW) MXU call.
    # 1/sqrt(dh) is already folded into the Q weights/bias.
    qkv = (jnp.dot(x_bf, wqkv_ref[0], preferred_element_type=jnp.float32)
           + bqkv_ref[0])                              # (S, 3*BW) f32

    heads = []
    for h in range(heads_per_block):                   # tiny, statically unrolled
        s0 = h * dh_pad                                # 128-lane aligned slices
        q_h = qkv[:, s0:s0 + dh_pad].astype(jnp.bfloat16)
        k_h = qkv[:, bw + s0:bw + s0 + dh_pad].astype(jnp.bfloat16)
        v_h = qkv[:, 2 * bw + s0:2 * bw + s0 + dh_pad].astype(jnp.bfloat16)

        # scores = q k^T without materializing k.T (contract last axes).
        scores = jax.lax.dot_general(
            q_h, k_h, dimension_numbers=(((1,), (1,)), ((), ())),
            preferred_element_type=jnp.float32)        # (S, S) f32
        scores = scores - jnp.max(scores, axis=-1, keepdims=True)
        p = jnp.exp(scores)
        p = p * pl.reciprocal(jnp.sum(p, axis=-1, keepdims=True), approx=True)

        heads.append(jnp.dot(p.astype(jnp.bfloat16), v_h,
                             preferred_element_type=jnp.float32)
                     .astype(jnp.bfloat16))            # (S, dh_pad)

    head_blk = jnp.concatenate(heads, axis=-1)         # (S, BW), lane-aligned
    # concat(all heads) @ Wo == sum over blocks of head_blk @ Wo[block rows]
    attn_acc[...] += jnp.dot(head_blk, wo_ref[0],
                             preferred_element_type=jnp.float32)

    @pl.when(blk == pl.num_programs(1) - 1)
    def _():
        x = x_ref[0].astype(jnp.float32)
        attn = attn_acc[...] + bo_ref[...]
        # dropout -> identity (eval mode)
        y1 = _layer_norm(x + attn, g1_ref[...], be1_ref[...])
        y1_bf = y1.astype(jnp.bfloat16)

        # FFN chunked over d_ff; reuse attn_acc as the f32 accumulator.
        attn_acc[...] = jnp.zeros_like(attn_acc)
        n_chunks = w1c_ref.shape[0]

        def ffn_chunk(i, carry):
            hid = (jnp.dot(y1_bf, w1c_ref[i], preferred_element_type=jnp.float32)
                   + b1c_ref[i])                                    # (S, FC)
            hid = jnp.maximum(hid, 0.0).astype(jnp.bfloat16)        # ReLU
            attn_acc[...] += jnp.dot(hid, w2c_ref[i],
                                     preferred_element_type=jnp.float32)
            return carry

        jax.lax.fori_loop(0, n_chunks, ffn_chunk, 0, unroll=2)

        ff = attn_acc[...] + b2_ref[...]
        out = _layer_norm(y1 + ff, g2_ref[...], be2_ref[...])
        o_ref[0] = out.astype(o_ref.dtype)


def encoder_layer(x, params, *, num_heads, ff_chunk=512, heads_per_block=None):
    """x: (B, S, D) float32.  params: dict of weights (see init_params)."""
    B, S, D = x.shape
    assert D % num_heads == 0
    dh = D // num_heads
    bf16 = jnp.bfloat16

    # ---- head packing geometry (lane alignment + head blocking) -----------
    dh_pad = ((dh + 127) // 128) * 128              # lane-aligned head segment
    if heads_per_block is None:
        heads_per_block = max(1, min(num_heads, 256 // dh_pad))
    heads_per_block = max(1, min(heads_per_block, num_heads))
    while num_heads % heads_per_block:
        heads_per_block -= 1
    num_blocks = num_heads // heads_per_block
    bw = heads_per_block * dh_pad
    pad = dh_pad - dh
    scale = 1.0 / (dh ** 0.5)                       # folded into Wq / bq

    def per_head(w):                                # (D, D) -> (H, D, dh)
        return jnp.transpose(w.reshape(D, num_heads, dh), (1, 0, 2))

    def to_blocks(a):                               # (H, D, dh) -> (NB, D, BW)
        if pad:
            a = jnp.pad(a, ((0, 0), (0, 0), (0, pad)))
        return (a.reshape(num_blocks, heads_per_block, D, dh_pad)
                 .transpose(0, 2, 1, 3)
                 .reshape(num_blocks, D, bw))

    def bias_blocks(b, s=1.0):                      # (1, D) -> (NB, 1, BW)
        bh = (b * s).reshape(num_heads, dh)
        if pad:
            bh = jnp.pad(bh, ((0, 0), (0, pad)))
        return bh.reshape(num_blocks, 1, bw)

    wqkv = jnp.concatenate(
        [to_blocks(per_head(params["wq"] * scale)),
         to_blocks(per_head(params["wk"])),
         to_blocks(per_head(params["wv"]))], axis=-1).astype(bf16)   # (NB,D,3BW)
    bqkv = jnp.concatenate(
        [bias_blocks(params["bq"], scale),
         bias_blocks(params["bk"]),
         bias_blocks(params["bv"])], axis=-1)                        # (NB,1,3BW)

    wo_h = params["wo"].reshape(num_heads, dh, D)
    if pad:
        wo_h = jnp.pad(wo_h, ((0, 0), (0, pad), (0, 0)))
    wo_blocks = wo_h.reshape(num_blocks, bw, D).astype(bf16)         # (NB,BW,D)

    # ---- FFN weight chunking: leading-axis chunks, lane-dense blocks ------
    d_ff = params["w1"].shape[-1]
    fc = min(ff_chunk, d_ff)
    d_ff_pad = ((d_ff + fc - 1) // fc) * fc
    n_chunks = d_ff_pad // fc
    dpad = d_ff_pad - d_ff
    w1p = jnp.pad(params["w1"], ((0, 0), (0, dpad)))
    b1p = jnp.pad(params["b1"], ((0, 0), (0, dpad)))
    w2p = jnp.pad(params["w2"], ((0, dpad), (0, 0)))
    w1c = w1p.reshape(D, n_chunks, fc).transpose(1, 0, 2).astype(bf16)  # (NC,D,FC)
    b1c = b1p.reshape(1, n_chunks, fc).transpose(1, 0, 2)               # (NC,1,FC)
    w2c = w2p.reshape(n_chunks, fc, D).astype(bf16)                     # (NC,FC,D)

    weight_args = [
        wqkv, bqkv, wo_blocks, params["bo"],
        params["g1"], params["be1"],
        w1c, b1c, w2c, params["b2"],
        params["g2"], params["be2"],
    ]

    def block_stream_spec(arr):             # one head-block per grid step
        blk = (1,) + arr.shape[1:]
        nrest = arr.ndim - 1
        return pl.BlockSpec(blk, lambda b, k, _n=nrest: (k,) + (0,) * _n)

    def const_spec(arr):                    # whole array, constant index_map
        zeros = (0,) * arr.ndim
        return pl.BlockSpec(arr.shape, lambda b, k, _z=zeros: _z)

    in_specs = [pl.BlockSpec((1, S, D), lambda b, k: (b, 0, 0))]
    in_specs += [block_stream_spec(a) for a in (wqkv, bqkv, wo_blocks)]
    in_specs += [const_spec(a) for a in weight_args[3:]]

    kernel = functools.partial(encoder_layer_kernel,
                               heads_per_block=heads_per_block, dh_pad=dh_pad)

    # vmem limit: ~0.75 of physical VMEM (96 MiB on v5e/v6e, 48 MiB on v7x).
    try:
        phys = getattr(pltpu.get_tpu_info(), "vmem_capacity_bytes",
                       128 * 1024 * 1024)
    except Exception:
        phys = 128 * 1024 * 1024
    vmem_limit = max(32 * 1024 * 1024,
                     min(int(0.75 * phys), 100 * 1024 * 1024))

    return pl.pallas_call(
        kernel,
        out_shape=jax.ShapeDtypeStruct((B, S, D), x.dtype),
        grid_spec=pltpu.PrefetchScalarGridSpec(
            num_scalar_prefetch=0,
            grid=(B, num_blocks),
            in_specs=in_specs,
            out_specs=pl.BlockSpec((1, S, D), lambda b, k: (b, 0, 0)),
            scratch_shapes=[pltpu.VMEM((S, D), jnp.float32),
                            pltpu.VMEM((S, D), jnp.bfloat16)],
        ),
        compiler_params=pltpu.CompilerParams(
            dimension_semantics=("parallel", "arbitrary"),
            vmem_limit_bytes=vmem_limit,
        ),
    )(x, *weight_args)


def init_params(key, d_model, d_ff):
    ks = jax.random.split(key, 6)
    s = 0.02
    return {
        "wq": s * jax.random.normal(ks[0], (d_model, d_model), jnp.float32),
        "wk": s * jax.random.normal(ks[1], (d_model, d_model), jnp.float32),
        "wv": s * jax.random.normal(ks[2], (d_model, d_model), jnp.float32),
        "wo": s * jax.random.normal(ks[3], (d_model, d_model), jnp.float32),
        "bq": jnp.zeros((1, d_model), jnp.float32),
        "bk": jnp.zeros((1, d_model), jnp.float32),
        "bv": jnp.zeros((1, d_model), jnp.float32),
        "bo": jnp.zeros((1, d_model), jnp.float32),
        "g1": jnp.ones((1, d_model), jnp.float32),
        "be1": jnp.zeros((1, d_model), jnp.float32),
        "w1": s * jax.random.normal(ks[4], (d_model, d_ff), jnp.float32),
        "b1": jnp.zeros((1, d_ff), jnp.float32),
        "w2": s * jax.random.normal(ks[5], (d_ff, d_model), jnp.float32),
        "b2": jnp.zeros((1, d_model), jnp.float32),
        "g2": jnp.ones((1, d_model), jnp.float32),
        "be2": jnp.zeros((1, d_model), jnp.float32),
    }


def encoder_layer_ref(x, p, *, num_heads):
    """Pure-JAX f32 reference of the same forward pass."""
    B, S, D = x.shape
    dh = D // num_heads

    def ln(y, g, b):
        mu = jnp.mean(y, -1, keepdims=True)
        var = jnp.mean((y - mu) ** 2, -1, keepdims=True)
        return (y - mu) / jnp.sqrt(var + 1e-5) * g + b

    q = x @ p["wq"] + p["bq"]
    k = x @ p["wk"] + p["bk"]
    v = x @ p["wv"] + p["bv"]
    q = q.reshape(B, S, num_heads, dh).transpose(0, 2, 1, 3)
    k = k.reshape(B, S, num_heads, dh).transpose(0, 2, 1, 3)
    v = v.reshape(B, S, num_heads, dh).transpose(0, 2, 1, 3)
    scores = jnp.einsum("bhqd,bhkd->bhqk", q, k) / (dh ** 0.5)
    pattn = jax.nn.softmax(scores, axis=-1)
    attn = jnp.einsum("bhqk,bhkd->bhqd", pattn, v)
    attn = attn.transpose(0, 2, 1, 3).reshape(B, S, D)
    attn = attn @ p["wo"] + p["bo"]
    x1 = ln(x + attn, p["g1"], p["be1"])
    ff = jnp.maximum(x1 @ p["w1"] + p["b1"], 0.0) @ p["w2"] + p["b2"]
    return ln(x1 + ff, p["g2"], p["be2"])


if __name__ == "__main__":
    # Small but representative: 2 head blocks (accumulation path) and
    # 2 FFN chunks (fori_loop path) are both exercised.
    B, S, D, H, DFF = 2, 16, 64, 4, 256
    key = jax.random.PRNGKey(0)
    kx, kp = jax.random.split(key)
    x = jax.random.normal(kx, (B, S, D), jnp.float32)
    params = init_params(kp, D, DFF)

    out = encoder_layer(x, params, num_heads=H, ff_chunk=128)
    out = jax.block_until_ready(out)

    ref = encoder_layer_ref(x, params, num_heads=H)
    assert out.shape == (B, S, D)
    err = float(jnp.max(jnp.abs(out - ref)))
    # bf16 MXU inputs -> looser tolerance than the pure-f32 reference.
    assert err < 2e-2, f"mismatch vs reference: max|diff|={err}"
    print("KERNEL_OK")
</pallas_src>

<mosaic_0001>
module attributes {stable_mosaic.version = 11 : i64} {
  func.func @encoder_layer_kernel(%arg0: i32, %arg1: i32, %arg2: memref<1x16x64xf32, #tpu.memory_space<vmem>>, %arg3: memref<1x64x768xbf16, #tpu.memory_space<vmem>>, %arg4: memref<1x1x768xf32, #tpu.memory_space<vmem>>, %arg5: memref<1x256x64xbf16, #tpu.memory_space<vmem>>, %arg6: memref<1x64xf32, #tpu.memory_space<vmem>>, %arg7: memref<1x64xf32, #tpu.memory_space<vmem>>, %arg8: memref<1x64xf32, #tpu.memory_space<vmem>>, %arg9: memref<2x64x128xbf16, #tpu.memory_space<vmem>>, %arg10: memref<2x1x128xf32, #tpu.memory_space<vmem>>, %arg11: memref<2x128x64xbf16, #tpu.memory_space<vmem>>, %arg12: memref<1x64xf32, #tpu.memory_space<vmem>>, %arg13: memref<1x64xf32, #tpu.memory_space<vmem>>, %arg14: memref<1x64xf32, #tpu.memory_space<vmem>>, %arg15: memref<1x16x64xf32, #tpu.memory_space<vmem>>, %arg16: memref<16x64xf32, #tpu.memory_space<vmem>>, %arg17: memref<16x64xbf16, #tpu.memory_space<vmem>>) attributes {dimension_semantics = [#tpu.dimension_semantics<parallel>, #tpu.dimension_semantics<arbitrary>], iteration_bounds = array<i64: 2, 2>, scalar_prefetch = 0 : i64, scratch_operands = 2 : i64, tpu.core_type = #tpu.core_type<tc>, window_params = [{transform_indices = @transform_0, window_bounds = array<i64: 1, 16, 64>}, {transform_indices = @transform_1, window_bounds = array<i64: 1, 64, 768>}, {transform_indices = @transform_2, window_bounds = array<i64: 1, 1, 768>}, {transform_indices = @transform_3, window_bounds = array<i64: 1, 256, 64>}, {pipeline_mode = #tpu.pipeline_mode<synchronous>, transform_indices = @transform_4, window_bounds = array<i64: 1, 64>}, {pipeline_mode = #tpu.pipeline_mode<synchronous>, transform_indices = @transform_5, window_bounds = array<i64: 1, 64>}, {pipeline_mode = #tpu.pipeline_mode<synchronous>, transform_indices = @transform_6, window_bounds = array<i64: 1, 64>}, {pipeline_mode = #tpu.pipeline_mode<synchronous>, transform_indices = @transform_7, window_bounds = array<i64: 2, 64, 128>}, {pipeline_mode = #tpu.pipeline_mode<synchronous>, transform_indices = @transform_8, window_bounds = array<i64: 2, 1, 128>}, {pipeline_mode = #tpu.pipeline_mode<synchronous>, transform_indices = @transform_9, window_bounds = array<i64: 2, 128, 64>}, {pipeline_mode = #tpu.pipeline_mode<synchronous>, transform_indices = @transform_10, window_bounds = array<i64: 1, 64>}, {pipeline_mode = #tpu.pipeline_mode<synchronous>, transform_indices = @transform_11, window_bounds = array<i64: 1, 64>}, {pipeline_mode = #tpu.pipeline_mode<synchronous>, transform_indices = @transform_12, window_bounds = array<i64: 1, 64>}, {transform_indices = @transform_13, window_bounds = array<i64: 1, 16, 64>}]} {
    %c0_i32 = arith.constant 0 : i32
    %0 = arith.cmpi eq, %arg1, %c0_i32 : i32
    %1 = arith.extui %0 : i1 to i32
    %c0_i32_0 = arith.constant 0 : i32
    %2 = arith.cmpi ne, %1, %c0_i32_0 : i32
    scf.if %2 {
      %cst_25 = arith.constant 0.000000e+00 : f32
      %61 = vector.broadcast %cst_25 : f32 to vector<16x64xf32>
      %c0_26 = arith.constant 0 : index
      %c0_27 = arith.constant 0 : index
      %62 = vector.load %arg16[%c0_26, %c0_27] : memref<16x64xf32, #tpu.memory_space<vmem>>, vector<16x64xf32>
      tpu.vector_store %arg16[%c0_26, %c0_27], %61 {strides = array<i32>} : memref<16x64xf32, #tpu.memory_space<vmem>>, vector<16x64xf32>,
      %c0_28 = arith.constant 0 : index
      %c0_29 = arith.constant 0 : index
      %c0_30 = arith.constant 0 : index
      %63 = vector.load %arg2[%c0_28, %c0_29, %c0_30] : memref<1x16x64xf32, #tpu.memory_space<vmem>>, vector<1x16x64xf32>
      %64 = vector.shape_cast %63 : vector<1x16x64xf32> to vector<16x64xf32>
      %65 = arith.truncf %64 : vector<16x64xf32> to vector<16x64xbf16>
      %c0_31 = arith.constant 0 : index
      %c0_32 = arith.constant 0 : index
      %66 = vector.load %arg17[%c0_31, %c0_32] : memref<16x64xbf16, #tpu.memory_space<vmem>>, vector<16x64xbf16>
      tpu.vector_store %arg17[%c0_31, %c0_32], %65 {strides = array<i32>} : memref<16x64xbf16, #tpu.memory_space<vmem>>, vector<16x64xbf16>,
    } else {
    }
    %c0 = arith.constant 0 : index
    %c0_1 = arith.constant 0 : index
    %3 = vector.load %arg17[%c0, %c0_1] : memref<16x64xbf16, #tpu.memory_space<vmem>>, vector<16x64xbf16>
    %c0_2 = arith.constant 0 : index
    %c0_3 = arith.constant 0 : index
    %c0_4 = arith.constant 0 : index
    %4 = vector.load %arg3[%c0_2, %c0_3, %c0_4] : memref<1x64x768xbf16, #tpu.memory_space<vmem>>, vector<1x64x768xbf16>
    %5 = vector.shape_cast %4 : vector<1x64x768xbf16> to vector<64x768xbf16>
    %cst = arith.constant dense<0.000000e+00> : vector<16x768xf32>
    %6 = tpu.matmul %3, %5, %cst {dimension_numbers = #tpu.dot_dimension_numbers<[1], [0], [0], [1], [0, 0, 1, 1], [], []>} : vector<16x64xbf16>, vector<64x768xbf16>, vector<16x768xf32> -> vector<16x768xf32>
    %c0_5 = arith.constant 0 : index
    %c0_6 = arith.constant 0 : index
    %c0_7 = arith.constant 0 : index
    %7 = vector.load %arg4[%c0_5, %c0_6, %c0_7] : memref<1x1x768xf32, #tpu.memory_space<vmem>>, vector<1x1x768xf32>
    %8 = vector.shape_cast %7 : vector<1x1x768xf32> to vector<1x768xf32>
    %9 = vector.broadcast %8 : vector<1x768xf32> to vector<16x768xf32>
    %10 = arith.addf %6, %9 : vector<16x768xf32>
    %11 = vector.extract_strided_slice %10 {offsets = [0, 0], sizes = [16, 128], strides = [1, 1]} : vector<16x768xf32> to vector<16x128xf32>
    %12 = arith.truncf %11 : vector<16x128xf32> to vector<16x128xbf16>
    %13 = vector.extract_strided_slice %10 {offsets = [0, 256], sizes = [16, 128], strides = [1, 1]} : vector<16x768xf32> to vector<16x128xf32>
    %14 = arith.truncf %13 : vector<16x128xf32> to vector<16x128xbf16>
    %15 = vector.extract_strided_slice %10 {offsets = [0, 512], sizes = [16, 128], strides = [1, 1]} : vector<16x768xf32> to vector<16x128xf32>
    %16 = arith.truncf %15 : vector<16x128xf32> to vector<16x128xbf16>
    %cst_8 = arith.constant dense<0.000000e+00> : vector<16x16xf32>
    %17 = tpu.matmul %12, %14, %cst_8 {dimension_numbers = #tpu.dot_dimension_numbers<[1], [1], [0], [0], [0, 0, 1, 0], [], []>} : vector<16x128xbf16>, vector<16x128xbf16>, vector<16x16xf32> -> vector<16x16xf32>
    %cst_9 = arith.constant dense<0xFF800000> : vector<16xf32>
    %18 = vector.multi_reduction <maximumf>, %17, %cst_9 [1] : vector<16x16xf32> to vector<16xf32>
    %19 = vector.shape_cast %18 : vector<16xf32> to vector<16x1xf32>
    %20 = vector.broadcast %19 : vector<16x1xf32> to vector<16x16xf32>
    %21 = arith.subf %17, %20 : vector<16x16xf32>
    %22 = math.exp %21 : vector<16x16xf32>
    %cst_10 = arith.constant dense<0.000000e+00> : vector<16xf32>
    %23 = vector.multi_reduction <add>, %22, %cst_10 [1] : vector<16x16xf32> to vector<16xf32>
    %24 = vector.shape_cast %23 : vector<16xf32> to vector<16x1xf32>
    %25 = tpu.reciprocal %24 {approx = true} : vector<16x1xf32> -> vector<16x1xf32>
    %26 = vector.broadcast %25 : vector<16x1xf32> to vector<16x16xf32>
    %27 = arith.mulf %22, %26 : vector<16x16xf32>
    %28 = arith.truncf %27 : vector<16x16xf32> to vector<16x16xbf16>
    %cst_11 = arith.constant dense<0.000000e+00> : vector<16x128xf32>
    %29 = tpu.matmul %28, %16, %cst_11 {dimension_numbers = #tpu.dot_dimension_numbers<[1], [0], [0], [1], [0, 0, 1, 1], [], []>} : vector<16x16xbf16>, vector<16x128xbf16>, vector<16x128xf32> -> vector<16x128xf32>
    %30 = arith.truncf %29 : vector<16x128xf32> to vector<16x128xbf16>
    %31 = vector.extract_strided_slice %10 {offsets = [0, 128], sizes = [16, 128], strides = [1, 1]} : vector<16x768xf32> to vector<16x128xf32>
    %32 = arith.truncf %31 : vector<16x128xf32> to vector<16x128xbf16>
    %33 = vector.extract_strided_slice %10 {offsets = [0, 384], sizes = [16, 128], strides = [1, 1]} : vector<16x768xf32> to vector<16x128xf32>
    %34 = arith.truncf %33 : vector<16x128xf32> to vector<16x128xbf16>
    %35 = vector.extract_strided_slice %10 {offsets = [0, 640], sizes = [16, 128], strides = [1, 1]} : vector<16x768xf32> to vector<16x128xf32>
    %36 = arith.truncf %35 : vector<16x128xf32> to vector<16x128xbf16>
    %cst_12 = arith.constant dense<0.000000e+00> : vector<16x16xf32>
    %37 = tpu.matmul %32, %34, %cst_12 {dimension_numbers = #tpu.dot_dimension_numbers<[1], [1], [0], [0], [0, 0, 1, 0], [], []>} : vector<16x128xbf16>, vector<16x128xbf16>, vector<16x16xf32> -> vector<16x16xf32>
    %cst_13 = arith.constant dense<0xFF800000> : vector<16xf32>
    %38 = vector.multi_reduction <maximumf>, %37, %cst_13 [1] : vector<16x16xf32> to vector<16xf32>
    %39 = vector.shape_cast %38 : vector<16xf32> to vector<16x1xf32>
    %40 = vector.broadcast %39 : vector<16x1xf32> to vector<16x16xf32>
    %41 = arith.subf %37, %40 : vector<16x16xf32>
    %42 = math.exp %41 : vector<16x16xf32>
    %cst_14 = arith.constant dense<0.000000e+00> : vector<16xf32>
    %43 = vector.multi_reduction <add>, %42, %cst_14 [1] : vector<16x16xf32> to vector<16xf32>
    %44 = vector.shape_cast %43 : vector<16xf32> to vector<16x1xf32>
    %45 = tpu.reciprocal %44 {approx = true} : vector<16x1xf32> -> vector<16x1xf32>
    %46 = vector.broadcast %45 : vector<16x1xf32> to vector<16x16xf32>
    %47 = arith.mulf %42, %46 : vector<16x16xf32>
    %48 = arith.truncf %47 : vector<16x16xf32> to vector<16x16xbf16>
    %cst_15 = arith.constant dense<0.000000e+00> : vector<16x128xf32>
    %49 = tpu.matmul %48, %36, %cst_15 {dimension_numbers = #tpu.dot_dimension_numbers<[1], [0], [0], [1], [0, 0, 1, 1], [], []>} : vector<16x16xbf16>, vector<16x128xbf16>, vector<16x128xf32> -> vector<16x128xf32>
    %50 = arith.truncf %49 : vector<16x128xf32> to vector<16x128xbf16>
    %51 = tpu.concatenate %30, %50 in 1 : vector<16x128xbf16>, vector<16x128xbf16> -> vector<16x256xbf16>
    %c0_16 = arith.constant 0 : index
    %c0_17 = arith.constant 0 : index
    %52 = vector.load %arg16[%c0_16, %c0_17] : memref<16x64xf32, #tpu.memory_space<vmem>>, vector<16x64xf32>
    %c0_18 = arith.constant 0 : index
    %c0_19 = arith.constant 0 : index
    %c0_20 = arith.constant 0 : index
    %53 = vector.load %arg5[%c0_18, %c0_19, %c0_20] : memref<1x256x64xbf16, #tpu.memory_space<vmem>>, vector<1x256x64xbf16>
    %54 = vector.shape_cast %53 : vector<1x256x64xbf16> to vector<256x64xbf16>
    %cst_21 = arith.constant dense<0.000000e+00> : vector<16x64xf32>
    %55 = tpu.matmul %51, %54, %cst_21 {dimension_numbers = #tpu.dot_dimension_numbers<[1], [0], [0], [1], [0, 0, 1, 1], [], []>} : vector<16x256xbf16>, vector<256x64xbf16>, vector<16x64xf32> -> vector<16x64xf32>
    %56 = arith.addf %52, %55 : vector<16x64xf32>
    %c0_22 = arith.constant 0 : index
    %c0_23 = arith.constant 0 : index
    %57 = vector.load %arg16[%c0_22, %c0_23] : memref<16x64xf32, #tpu.memory_space<vmem>>, vector<16x64xf32>
    tpu.vector_store %arg16[%c0_22, %c0_23], %56 {strides = array<i32>} : memref<16x64xf32, #tpu.memory_space<vmem>>, vector<16x64xf32>,
    %c1_i32 = arith.constant 1 : i32
    %58 = arith.cmpi eq, %arg1, %c1_i32 : i32
    %59 = arith.extui %58 : i1 to i32
    %c0_i32_24 = arith.constant 0 : i32
    %60 = arith.cmpi ne, %59, %c0_i32_24 : i32
    scf.if %60 {
      %c0_25 = arith.constant 0 : index
      %c0_26 = arith.constant 0 : index
      %c0_27 = arith.constant 0 : index
      %61 = vector.load %arg2[%c0_25, %c0_26, %c0_27] : memref<1x16x64xf32, #tpu.memory_space<vmem>>, vector<1x16x64xf32>
      %62 = vector.shape_cast %61 : vector<1x16x64xf32> to vector<16x64xf32>
      %c0_28 = arith.constant 0 : index
      %c0_29 = arith.constant 0 : index
      %63 = vector.load %arg16[%c0_28, %c0_29] : memref<16x64xf32, #tpu.memory_space<vmem>>, vector<16x64xf32>
      %c0_30 = arith.constant 0 : index
      %c0_31 = arith.constant 0 : index
      %64 = vector.load %arg6[%c0_30, %c0_31] : memref<1x64xf32, #tpu.memory_space<vmem>>, vector<1x64xf32>
      %65 = vector.broadcast %64 : vector<1x64xf32> to vector<16x64xf32>
      %66 = arith.addf %63, %65 : vector<16x64xf32>
      %67 = arith.addf %62, %66 : vector<16x64xf32>
      %c0_32 = arith.constant 0 : index
      %c0_33 = arith.constant 0 : index
      %68 = vector.load %arg7[%c0_32, %c0_33] : memref<1x64xf32, #tpu.memory_space<vmem>>, vector<1x64xf32>
      %c0_34 = arith.constant 0 : index
      %c0_35 = arith.constant 0 : index
      %69 = vector.load %arg8[%c0_34, %c0_35] : memref<1x64xf32, #tpu.memory_space<vmem>>, vector<1x64xf32>
      %cst_36 = arith.constant dense<0.000000e+00> : vector<16xf32>
      %70 = vector.multi_reduction <add>, %67, %cst_36 [1] : vector<16x64xf32> to vector<16xf32>
      %71 = vector.shape_cast %70 : vector<16xf32> to vector<16x1xf32>
      %cst_37 = arith.constant 6.400000e+01 : f32
      %72 = vector.broadcast %cst_37 : f32 to vector<16x1xf32>
      %73 = arith.divf %71, %72 : vector<16x1xf32>
      %74 = vector.broadcast %73 : vector<16x1xf32> to vector<16x64xf32>
      %75 = arith.subf %67, %74 : vector<16x64xf32>
      %76 = arith.mulf %75, %75 : vector<16x64xf32>
      %cst_38 = arith.constant dense<0.000000e+00> : vector<16xf32>
      %77 = vector.multi_reduction <add>, %76, %cst_38 [1] : vector<16x64xf32> to vector<16xf32>
      %78 = vector.shape_cast %77 : vector<16xf32> to vector<16x1xf32>
      %cst_39 = arith.constant 6.400000e+01 : f32
      %79 = vector.broadcast %cst_39 : f32 to vector<16x1xf32>
      %80 = arith.divf %78, %79 : vector<16x1xf32>
      %81 = vector.broadcast %73 : vector<16x1xf32> to vector<16x64xf32>
      %82 = arith.subf %67, %81 : vector<16x64xf32>
      %cst_40 = arith.constant 9.99999974E-6 : f32
      %83 = vector.broadcast %cst_40 : f32 to vector<16x1xf32>
      %84 = arith.addf %80, %83 : vector<16x1xf32>
      %85 = math.rsqrt %84 : vector<16x1xf32>
      %86 = vector.broadcast %85 : vector<16x1xf32> to vector<16x64xf32>
      %87 = arith.mulf %82, %86 : vector<16x64xf32>
      %88 = vector.broadcast %68 : vector<1x64xf32> to vector<16x64xf32>
      %89 = arith.mulf %87, %88 : vector<16x64xf32>
      %90 = vector.broadcast %69 : vector<1x64xf32> to vector<16x64xf32>
      %91 = arith.addf %89, %90 : vector<16x64xf32>
      %92 = arith.truncf %91 : vector<16x64xf32> to vector<16x64xbf16>
      %cst_41 = arith.constant 0.000000e+00 : f32
      %93 = vector.broadcast %cst_41 : f32 to vector<16x64xf32>
      %c0_42 = arith.constant 0 : index
      %c0_43 = arith.constant 0 : index
      %94 = vector.load %arg16[%c0_42, %c0_43] : memref<16x64xf32, #tpu.memory_space<vmem>>, vector<16x64xf32>
      tpu.vector_store %arg16[%c0_42, %c0_43], %93 {strides = array<i32>} : memref<16x64xf32, #tpu.memory_space<vmem>>, vector<16x64xf32>,
      %c0_i32_44 = arith.constant 0 : i32
      %95 = arith.index_cast %c0_i32_44 : i32 to index
      %c0_45 = arith.constant 0 : index
      %c0_46 = arith.constant 0 : index
      %96 = vector.load %arg9[%95, %c0_45, %c0_46] : memref<2x64x128xbf16, #tpu.memory_space<vmem>>, vector<1x64x128xbf16>
      %97 = vector.shape_cast %96 : vector<1x64x128xbf16> to vector<64x128xbf16>
      %cst_47 = arith.constant dense<0.000000e+00> : vector<16x128xf32>
      %98 = tpu.matmul %92, %97, %cst_47 {dimension_numbers = #tpu.dot_dimension_numbers<[1], [0], [0], [1], [0, 0, 1, 1], [], []>} : vector<16x64xbf16>, vector<64x128xbf16>, vector<16x128xf32> -> vector<16x128xf32>
      %99 = arith.index_cast %c0_i32_44 : i32 to index
      %c0_48 = arith.constant 0 : index
      %c0_49 = arith.constant 0 : index
      %100 = vector.load %arg10[%99, %c0_48, %c0_49] : memref<2x1x128xf32, #tpu.memory_space<vmem>>, vector<1x1x128xf32>
      %101 = vector.shape_cast %100 : vector<1x1x128xf32> to vector<1x128xf32>
      %102 = vector.broadcast %101 : vector<1x128xf32> to vector<16x128xf32>
      %103 = arith.addf %98, %102 : vector<16x128xf32>
      %cst_50 = arith.constant 0.000000e+00 : f32
      %104 = vector.broadcast %cst_50 : f32 to vector<16x128xf32>
      %105 = arith.maximumf %103, %104 : vector<16x128xf32>
      %106 = arith.truncf %105 : vector<16x128xf32> to vector<16x128xbf16>
      %c0_51 = arith.constant 0 : index
      %c0_52 = arith.constant 0 : index
      %107 = vector.load %arg16[%c0_51, %c0_52] : memref<16x64xf32, #tpu.memory_space<vmem>>, vector<16x64xf32>
      %108 = arith.index_cast %c0_i32_44 : i32 to index
      %c0_53 = arith.constant 0 : index
      %c0_54 = arith.constant 0 : index
      %109 = vector.load %arg11[%108, %c0_53, %c0_54] : memref<2x128x64xbf16, #tpu.memory_space<vmem>>, vector<1x128x64xbf16>
      %110 = vector.shape_cast %109 : vector<1x128x64xbf16> to vector<128x64xbf16>
      %cst_55 = arith.constant dense<0.000000e+00> : vector<16x64xf32>
      %111 = tpu.matmul %106, %110, %cst_55 {dimension_numbers = #tpu.dot_dimension_numbers<[1], [0], [0], [1], [0, 0, 1, 1], [], []>} : vector<16x128xbf16>, vector<128x64xbf16>, vector<16x64xf32> -> vector<16x64xf32>
      %112 = arith.addf %107, %111 : vector<16x64xf32>
      %c0_56 = arith.constant 0 : index
      %c0_57 = arith.constant 0 : index
      %113 = vector.load %arg16[%c0_56, %c0_57] : memref<16x64xf32, #tpu.memory_space<vmem>>, vector<16x64xf32>
      tpu.vector_store %arg16[%c0_56, %c0_57], %112 {strides = array<i32>} : memref<16x64xf32, #tpu.memory_space<vmem>>, vector<16x64xf32>,
      %c1_i32_58 = arith.constant 1 : i32
      %114 = arith.index_cast %c1_i32_58 : i32 to index
      %c0_59 = arith.constant 0 : index
      %c0_60 = arith.constant 0 : index
      %115 = vector.load %arg9[%114, %c0_59, %c0_60] : memref<2x64x128xbf16, #tpu.memory_space<vmem>>, vector<1x64x128xbf16>
      %116 = vector.shape_cast %115 : vector<1x64x128xbf16> to vector<64x128xbf16>
      %cst_61 = arith.constant dense<0.000000e+00> : vector<16x128xf32>
      %117 = tpu.matmul %92, %116, %cst_61 {dimension_numbers = #tpu.dot_dimension_numbers<[1], [0], [0], [1], [0, 0, 1, 1], [], []>} : vector<16x64xbf16>, vector<64x128xbf16>, vector<16x128xf32> -> vector<16x128xf32>
      %118 = arith.index_cast %c1_i32_58 : i32 to index
      %c0_62 = arith.constant 0 : index
      %c0_63 = arith.constant 0 : index
      %119 = vector.load %arg10[%118, %c0_62, %c0_63] : memref<2x1x128xf32, #tpu.memory_space<vmem>>, vector<1x1x128xf32>
      %120 = vector.shape_cast %119 : vector<1x1x128xf32> to vector<1x128xf32>
      %121 = vector.broadcast %120 : vector<1x128xf32> to vector<16x128xf32>
      %122 = arith.addf %117, %121 : vector<16x128xf32>
      %cst_64 = arith.constant 0.000000e+00 : f32
      %123 = vector.broadcast %cst_64 : f32 to vector<16x128xf32>
      %124 = arith.maximumf %122, %123 : vector<16x128xf32>
      %125 = arith.truncf %124 : vector<16x128xf32> to vector<16x128xbf16>
      %c0_65 = arith.constant 0 : index
      %c0_66 = arith.constant 0 : index
      %126 = vector.load %arg16[%c0_65, %c0_66] : memref<16x64xf32, #tpu.memory_space<vmem>>, vector<16x64xf32>
      %127 = arith.index_cast %c1_i32_58 : i32 to index
      %c0_67 = arith.constant 0 : index
      %c0_68 = arith.constant 0 : index
      %128 = vector.load %arg11[%127, %c0_67, %c0_68] : memref<2x128x64xbf16, #tpu.memory_space<vmem>>, vector<1x128x64xbf16>
      %129 = vector.shape_cast %128 : vector<1x128x64xbf16> to vector<128x64xbf16>
      %cst_69 = arith.constant dense<0.000000e+00> : vector<16x64xf32>
      %130 = tpu.matmul %125, %129, %cst_69 {dimension_numbers = #tpu.dot_dimension_numbers<[1], [0], [0], [1], [0, 0, 1, 1], [], []>} : vector<16x128xbf16>, vector<128x64xbf16>, vector<16x64xf32> -> vector<16x64xf32>
      %131 = arith.addf %126, %130 : vector<16x64xf32>
      %c0_70 = arith.constant 0 : index
      %c0_71 = arith.constant 0 : index
      %132 = vector.load %arg16[%c0_70, %c0_71] : memref<16x64xf32, #tpu.memory_space<vmem>>, vector<16x64xf32>
      tpu.vector_store %arg16[%c0_70, %c0_71], %131 {strides = array<i32>} : memref<16x64xf32, #tpu.memory_space<vmem>>, vector<16x64xf32>,
      %c2_i32 = arith.constant 2 : i32
      %c0_72 = arith.constant 0 : index
      %c0_73 = arith.constant 0 : index
      %133 = vector.load %arg16[%c0_72, %c0_73] : memref<16x64xf32, #tpu.memory_space<vmem>>, vector<16x64xf32>
      %c0_74 = arith.constant 0 : index
      %c0_75 = arith.constant 0 : index
      %134 = vector.load %arg12[%c0_74, %c0_75] : memref<1x64xf32, #tpu.memory_space<vmem>>, vector<1x64xf32>
      %135 = vector.broadcast %134 : vector<1x64xf32> to vector<16x64xf32>
      %136 = arith.addf %133, %135 : vector<16x64xf32>
      %137 = arith.addf %91, %136 : vector<16x64xf32>
      %c0_76 = arith.constant 0 : index
      %c0_77 = arith.constant 0 : index
      %138 = vector.load %arg13[%c0_76, %c0_77] : memref<1x64xf32, #tpu.memory_space<vmem>>, vector<1x64xf32>
      %c0_78 = arith.constant 0 : index
      %c0_79 = arith.constant 0 : index
      %139 = vector.load %arg14[%c0_78, %c0_79] : memref<1x64xf32, #tpu.memory_space<vmem>>, vector<1x64xf32>
      %cst_80 = arith.constant dense<0.000000e+00> : vector<16xf32>
      %140 = vector.multi_reduction <add>, %137, %cst_80 [1] : vector<16x64xf32> to vector<16xf32>
      %141 = vector.shape_cast %140 : vector<16xf32> to vector<16x1xf32>
      %cst_81 = arith.constant 6.400000e+01 : f32
      %142 = vector.broadcast %cst_81 : f32 to vector<16x1xf32>
      %143 = arith.divf %141, %142 : vector<16x1xf32>
      %144 = vector.broadcast %143 : vector<16x1xf32> to vector<16x64xf32>
      %145 = arith.subf %137, %144 : vector<16x64xf32>
      %146 = arith.mulf %145, %145 : vector<16x64xf32>
      %cst_82 = arith.constant dense<0.000000e+00> : vector<16xf32>
      %147 = vector.multi_reduction <add>, %146, %cst_82 [1] : vector<16x64xf32> to vector<16xf32>
      %148 = vector.shape_cast %147 : vector<16xf32> to vector<16x1xf32>
      %cst_83 = arith.constant 6.400000e+01 : f32
      %149 = vector.broadcast %cst_83 : f32 to vector<16x1xf32>
      %150 = arith.divf %148, %149 : vector<16x1xf32>
      %151 = vector.broadcast %143 : vector<16x1xf32> to vector<16x64xf32>
      %152 = arith.subf %137, %151 : vector<16x64xf32>
      %cst_84 = arith.constant 9.99999974E-6 : f32
      %153 = vector.broadcast %cst_84 : f32 to vector<16x1xf32>
      %154 = arith.addf %150, %153 : vector<16x1xf32>
      %155 = math.rsqrt %154 : vector<16x1xf32>
      %156 = vector.broadcast %155 : vector<16x1xf32> to vector<16x64xf32>
      %157 = arith.mulf %152, %156 : vector<16x64xf32>
      %158 = vector.broadcast %138 : vector<1x64xf32> to vector<16x64xf32>
      %159 = arith.mulf %157, %158 : vector<16x64xf32>
      %160 = vector.broadcast %139 : vector<1x64xf32> to vector<16x64xf32>
      %161 = arith.addf %159, %160 : vector<16x64xf32>
      %c0_85 = arith.constant 0 : index
      %c0_86 = arith.constant 0 : index
      %c0_87 = arith.constant 0 : index
      %162 = vector.load %arg15[%c0_85, %c0_86, %c0_87] : memref<1x16x64xf32, #tpu.memory_space<vmem>>, vector<1x16x64xf32>
      %163 = vector.shape_cast %162 : vector<1x16x64xf32> to vector<16x64xf32>
      %164 = vector.shape_cast %161 : vector<16x64xf32> to vector<1x16x64xf32>
      tpu.vector_store %arg15[%c0_85, %c0_86, %c0_87], %164 {strides = array<i32>} : memref<1x16x64xf32, #tpu.memory_space<vmem>>, vector<1x16x64xf32>,
    } else {
    }
    return
  }
  func.func @transform_0(%arg0: i32, %arg1: i32) -> (i32, i32, i32) {
    %c0_i32 = arith.constant 0 : i32
    %c0_i32_0 = arith.constant 0 : i32
    %c0_i32_1 = arith.constant 0 : i32
    return %arg0, %c0_i32, %c0_i32_0 : i32, i32, i32
  }
  func.func @transform_1(%arg0: i32, %arg1: i32) -> (i32, i32, i32) {
    %c0_i32 = arith.constant 0 : i32
    %c0_i32_0 = arith.constant 0 : i32
    %c0_i32_1 = arith.constant 0 : i32
    return %arg1, %c0_i32, %c0_i32_0 : i32, i32, i32
  }
  func.func @transform_2(%arg0: i32, %arg1: i32) -> (i32, i32, i32) {
    %c0_i32 = arith.constant 0 : i32
    %c0_i32_0 = arith.constant 0 : i32
    %c0_i32_1 = arith.constant 0 : i32
    return %arg1, %c0_i32, %c0_i32_0 : i32, i32, i32
  }
  func.func @transform_3(%arg0: i32, %arg1: i32) -> (i32, i32, i32) {
    %c0_i32 = arith.constant 0 : i32
    %c0_i32_0 = arith.constant 0 : i32
    %c0_i32_1 = arith.constant 0 : i32
    return %arg1, %c0_i32, %c0_i32_0 : i32, i32, i32
  }
  func.func @transform_4(%arg0: i32, %arg1: i32) -> (i32, i32) {
    %c0_i32 = arith.constant 0 : i32
    %c0_i32_0 = arith.constant 0 : i32
    %c0_i32_1 = arith.constant 0 : i32
    return %c0_i32, %c0_i32_0 : i32, i32
  }
  func.func @transform_5(%arg0: i32, %arg1: i32) -> (i32, i32) {
    %c0_i32 = arith.constant 0 : i32
    %c0_i32_0 = arith.constant 0 : i32
    %c0_i32_1 = arith.constant 0 : i32
    return %c0_i32, %c0_i32_0 : i32, i32
  }
  func.func @transform_6(%arg0: i32, %arg1: i32) -> (i32, i32) {
    %c0_i32 = arith.constant 0 : i32
    %c0_i32_0 = arith.constant 0 : i32
    %c0_i32_1 = arith.constant 0 : i32
    return %c0_i32, %c0_i32_0 : i32, i32
  }
  func.func @transform_7(%arg0: i32, %arg1: i32) -> (i32, i32, i32) {
    %c0_i32 = arith.constant 0 : i32
    %c0_i32_0 = arith.constant 0 : i32
    %c0_i32_1 = arith.constant 0 : i32
    %c0_i32_2 = arith.constant 0 : i32
    return %c0_i32, %c0_i32_0, %c0_i32_1 : i32, i32, i32
  }
  func.func @transform_8(%arg0: i32, %arg1: i32) -> (i32, i32, i32) {
    %c0_i32 = arith.constant 0 : i32
    %c0_i32_0 = arith.constant 0 : i32
    %c0_i32_1 = arith.constant 0 : i32
    %c0_i32_2 = arith.constant 0 : i32
    return %c0_i32, %c0_i32_0, %c0_i32_1 : i32, i32, i32
  }
  func.func @transform_9(%arg0: i32, %arg1: i32) -> (i32, i32, i32) {
    %c0_i32 = arith.constant 0 : i32
    %c0_i32_0 = arith.constant 0 : i32
    %c0_i32_1 = arith.constant 0 : i32
    %c0_i32_2 = arith.constant 0 : i32
    return %c0_i32, %c0_i32_0, %c0_i32_1 : i32, i32, i32
  }
  func.func @transform_10(%arg0: i32, %arg1: i32) -> (i32, i32) {
    %c0_i32 = arith.constant 0 : i32
    %c0_i32_0 = arith.constant 0 : i32
    %c0_i32_1 = arith.constant 0 : i32
    return %c0_i32, %c0_i32_0 : i32, i32
  }
  func.func @transform_11(%arg0: i32, %arg1: i32) -> (i32, i32) {
    %c0_i32 = arith.constant 0 : i32
    %c0_i32_0 = arith.constant 0 : i32
    %c0_i32_1 = arith.constant 0 : i32
    return %c0_i32, %c0_i32_0 : i32, i32
  }
  func.func @transform_12(%arg0: i32, %arg1: i32) -> (i32, i32) {
    %c0_i32 = arith.constant 0 : i32
    %c0_i32_0 = arith.constant 0 : i32
    %c0_i32_1 = arith.constant 0 : i32
    return %c0_i32, %c0_i32_0 : i32, i32
  }
  func.func @transform_13(%arg0: i32, %arg1: i32) -> (i32, i32, i32) {
    %c0_i32 = arith.constant 0 : i32
    %c0_i32_0 = arith.constant 0 : i32
    %c0_i32_1 = arith.constant 0 : i32
    return %arg0, %c0_i32, %c0_i32_0 : i32, i32, i32
  }
}

</mosaic_0001>

<llo_original>
// kernel: tpu_custom_call.1
$region0: #{tpu_custom_call.1}
  #allocation0 [shape = 'u32[]', space=smem, size = 0x4, offset = 0x4, fixed_abs, tag = 'smem constant byte address 0x4 - core index']
  #allocation1 [shape = 'u32[144,128]{1,0:T(1,128)}', space=vmem, size = 0x12000, scoped, tag = 'internal scratch']
  #allocation2 [shape = 'f32[16,64]{1,0:T(8,128)}', space=vmem, size = 0x2000, scoped, tag = 'scratch operand']
  #allocation3 [shape = 'bf16[16,64]{1,0:T(8,128)(2,1)}', space=vmem, size = 0x1000, scoped, tag = 'scratch operand']
  %s0 = inlined_call_operand.hbm [shape: f32[2,16,64], index: 0, kind: input, shape index: {}]
  %s1 = inlined_call_operand.vmem [shape: bf16[2,64,768], index: 1, kind: input, shape index: {}]
  %s2 = inlined_call_operand.hbm [shape: f32[2,1,768], index: 2, kind: input, shape index: {}]
  %s3 = inlined_call_operand.vmem [shape: bf16[2,256,64], index: 3, kind: input, shape index: {}]
  %s4 = inlined_call_operand.vmem [shape: f32[1,64], index: 4, kind: input, shape index: {}]
  %s5 = inlined_call_operand.vmem [shape: f32[1,64], index: 5, kind: input, shape index: {}]
  %s6 = inlined_call_operand.vmem [shape: f32[1,64], index: 6, kind: input, shape index: {}]
  %s7 = inlined_call_operand.vmem [shape: bf16[2,64,128], index: 7, kind: input, shape index: {}]
  %s8 = inlined_call_operand.vmem [shape: f32[2,1,128], index: 8, kind: input, shape index: {}]
  %s9 = inlined_call_operand.vmem [shape: bf16[2,128,64], index: 9, kind: input, shape index: {}]
  %s10 = inlined_call_operand.vmem [shape: f32[1,64], index: 10, kind: input, shape index: {}]
  %s11 = inlined_call_operand.vmem [shape: f32[1,64], index: 11, kind: input, shape index: {}]
  %s12 = inlined_call_operand.vmem [shape: f32[1,64], index: 12, kind: input, shape index: {}]
  %s13 = inlined_call_operand.hbm [shape: f32[2,16,64], index: 13, kind: output, shape index: {}]
  %s14 = sld [smem:[#allocation0]]
  $region101: #{tpu_custom_call.1} parent=0
    _
  %s16 = ssub.s32 1, %s14
  %s17 = scalar_select 0, %s16, %s14
  $region1: #{tpu_custom_call.1} parent=0
    #allocation4 [shape = 'u8[16384]{0}', space=vmem, size = 0x4000, scoped, tag = 'input window, operand 0']
    #allocation5 [shape = 's32[2]{0}', space=sflag, size = 0x8, scoped, tag = 'scoped memory for tpu_custom_call.1']
    #allocation6 [shape = 's32[2]{0}', space=sflag, size = 0x8, scoped, tag = 'scoped memory for tpu_custom_call.1']
    #allocation7 [shape = 'u8[6144]{0}', space=vmem, size = 0x1800, scoped, tag = 'input window, operand 2']
    #allocation8 [shape = 's32[2]{0}', space=sflag, size = 0x8, scoped, tag = 'scoped memory for tpu_custom_call.1']
    #allocation9 [shape = 'u8[16384]{0}', space=vmem, size = 0x4000, scoped, tag = 'output window, operand 0']
    %18 = vsyncpa [#allocation5], 0
    %s19 = scalar_lea.sflag [#allocation5], 1
    %20 = vsyncpa %s19, 0
    %21 = vsyncpa [#allocation8], 0
    %s22 = scalar_lea.sflag [#allocation8], 1
    %23 = vsyncpa %s22, 0
    %24 = vsyncpa [#allocation6], 0
    %s25 = scalar_lea.sflag [#allocation6], 1
    %26 = vsyncpa %s25, 0
    loop: start=0, step=1, limit=6
    $region2: #{tpu_custom_call.1} parent=1 // loop_pre_header
      _
    $region3: #{tpu_custom_call.1} parent=1 // loop_header
      %s28 = sphi 0, %s32
      %p29 = scmp.ge.s32.totalorder %s28, 6
      %s35 = sphi 0, %s47
      %s36 = sphi 0, %s43
      %s37 = sphi 0, %s35
      %s38 = sphi 0, %s36
      %s39 = sphi 0, %s37
      %s40 = sphi 0, %s38
      %s50 = sphi 0, %s52
      %s53 = sphi 0, %s50
      %s54 = sphi 0, %s53
      %s70 = sphi 0, %s54
      %s76 = sphi 0, %s78
      %s79 = sphi 0, %s76
      %s80 = sphi 0, %s79
      %s96 = sphi 0, %s80
      %s102 = sphi 0, %s104
      %s105 = sphi 0, %s102
      %s106 = sphi 0, %s105
      %s122 = sphi 0, %s106
      %s128 = sphi 0, %s130
      %s131 = sphi 0, %s128
      %s132 = sphi 0, %s131
      %s148 = sphi 0, %s132
      %s152 = sphi 0, %s152
      %s154 = sphi 0, %s152
      %s155 = sphi 0, %s154
      %s169 = sphi 0, %s155
      %s173 = sphi 0, %s173
      %s175 = sphi 0, %s173
      %s176 = sphi 0, %s175
      %s190 = sphi 0, %s176
      %s194 = sphi 0, %s194
      %s196 = sphi 0, %s194
      %s197 = sphi 0, %s196
      %s211 = sphi 0, %s197
      %s215 = sphi 0, %s215
      %s217 = sphi 0, %s215
      %s218 = sphi 0, %s217
      %s232 = sphi 0, %s218
      %s236 = sphi 0, %s236
      %s238 = sphi 0, %s236
      %s239 = sphi 0, %s238
      %s253 = sphi 0, %s239
      %s257 = sphi 0, %s257
      %s259 = sphi 0, %s257
      %s260 = sphi 0, %s259
      %s274 = sphi 0, %s260
      %s278 = sphi 0, %s278
      %s280 = sphi 0, %s278
      %s281 = sphi 0, %s280
      %s295 = sphi 0, %s281
      %s299 = sphi 0, %s299
      %s301 = sphi 0, %s299
      %s302 = sphi 0, %s301
      %s316 = sphi 0, %s302
      %s320 = sphi 0, %s320
      %s322 = sphi 0, %s320
      %s323 = sphi 0, %s322
      %s337 = sphi 0, %s323
      %s343 = sphi 0, %s345
      %s346 = sphi 0, %s343
      %s347 = sphi 0, %s346
      %s363 = sphi 0, %s347
    $region4: #{tpu_custom_call.1} parent=1 // loop_header_branch
      %31 = sbr.rel (%p29) target = $region8
    $region5: #{tpu_custom_call.1} parent=1 // loop_body
      %s33 = ssub.s32 %s28, 1
      %s34 = ssub.s32 %s28, 2
      %s41 = sadd.s32 1, %s36
      %p42 = scmp.ge.s32.totalorder %s41, 2
      %s43 = scalar_select %p42, 0, %s41
      %s44 = sadd.s32 1, %s35
      %s45 = scalar_select %p42, %s44, %s35
      %p46 = scmp.ge.s32.totalorder %s45, 2
      %s47 = scalar_select %p46, 0, %s45
      %s48 = ssub.s32 %s35, %s47
      %p49 = scmp.eq.s32.totalorder %s48, 0
      %s51 = sadd.s32 %s50, 1
      %s52 = scalar_select %p49, %s50, %s51
      %p55 = pneg %p49
      %p56 = scmp.eq.s32.totalorder %s28, 3
      %p57 = por %p55, %p56
      %p58 = scmp.ne.s32.totalorder %s50, %s53
      %p59 = scmp.eq.s32.totalorder %s28, 0
      %p60 = por %p58, %p59
      %p61 = scmp.ne.s32.totalorder %s50, %s53
      %p62 = scmp.eq.s32.totalorder %s33, 3
      %p63 = por %p61, %p62
      %p64 = scmp.ne.s32.totalorder %s53, %s54
      %p65 = scmp.eq.s32.totalorder %s33, 0
      %p66 = por %p64, %p65
      %p67 = scmp.ne.s32.totalorder %s53, %s54
      %p68 = scmp.eq.s32.totalorder %s34, 3
      %p69 = por %p67, %p68
      %p71 = scmp.ne.s32.totalorder %s54, %s70
      %p72 = scmp.eq.s32.totalorder %s34, 0
      %p73 = por %p71, %p72
      %s74 = ssub.s32 %s36, %s43
      %p75 = scmp.eq.s32.totalorder %s74, 0
      %s77 = sadd.s32 %s76, 1
      %s78 = scalar_select %p75, %s76, %s77
      %p81 = pneg %p75
      %p82 = scmp.eq.s32.totalorder %s28, 3
      %p83 = por %p81, %p82
      %p84 = scmp.ne.s32.totalorder %s76, %s79
      %p85 = scmp.eq.s32.totalorder %s28, 0
      %p86 = por %p84, %p85
      %p87 = scmp.ne.s32.totalorder %s76, %s79
      %p88 = scmp.eq.s32.totalorder %s33, 3
      %p89 = por %p87, %p88
      %p90 = scmp.ne.s32.totalorder %s79, %s80
      %p91 = scmp.eq.s32.totalorder %s33, 0
      %p92 = por %p90, %p91
      %p93 = scmp.ne.s32.totalorder %s79, %s80
      %p94 = scmp.eq.s32.totalorder %s34, 3
      %p95 = por %p93, %p94
      %p97 = scmp.ne.s32.totalorder %s80, %s96
      %p98 = scmp.eq.s32.totalorder %s34, 0
      %p99 = por %p97, %p98
      %s100 = ssub.s32 %s36, %s43
      %p101 = scmp.eq.s32.totalorder %s100, 0
      %s103 = sadd.s32 %s102, 1
      %s104 = scalar_select %p101, %s102, %s103
      %p107 = pneg %p101
      %p108 = scmp.eq.s32.totalorder %s28, 3
      %p109 = por %p107, %p108
      %p110 = scmp.ne.s32.totalorder %s102, %s105
      %p111 = scmp.eq.s32.totalorder %s28, 0
      %p112 = por %p110, %p111
      %p113 = scmp.ne.s32.totalorder %s102, %s105
      %p114 = scmp.eq.s32.totalorder %s33, 3
      %p115 = por %p113, %p114
      %p116 = scmp.ne.s32.totalorder %s105, %s106
      %p117 = scmp.eq.s32.totalorder %s33, 0
      %p118 = por %p116, %p117
      %p119 = scmp.ne.s32.totalorder %s105, %s106
      %p120 = scmp.eq.s32.totalorder %s34, 3
      %p121 = por %p119, %p120
      %p123 = scmp.ne.s32.totalorder %s106, %s122
      %p124 = scmp.eq.s32.totalorder %s34, 0
      %p125 = por %p123, %p124
      %s126 = ssub.s32 %s36, %s43
      %p127 = scmp.eq.s32.totalorder %s126, 0
      %s129 = sadd.s32 %s128, 1
      %s130 = scalar_select %p127, %s128, %s129
      %p133 = pneg %p127
      %p134 = scmp.eq.s32.totalorder %s28, 3
      %p135 = por %p133, %p134
      %p136 = scmp.ne.s32.totalorder %s128, %s131
      %p137 = scmp.eq.s32.totalorder %s28, 0
      %p138 = por %p136, %p137
      %p139 = scmp.ne.s32.totalorder %s128, %s131
      %p140 = scmp.eq.s32.totalorder %s33, 3
      %p141 = por %p139, %p140
      %p142 = scmp.ne.s32.totalorder %s131, %s132
      %p143 = scmp.eq.s32.totalorder %s33, 0
      %p144 = por %p142, %p143
      %p145 = scmp.ne.s32.totalorder %s131, %s132
      %p146 = scmp.eq.s32.totalorder %s34, 3
      %p147 = por %p145, %p146
      %p149 = scmp.ne.s32.totalorder %s132, %s148
      %p150 = scmp.eq.s32.totalorder %s34, 0
      %p151 = por %p149, %p150
      %s153 = sadd.s32 %s152, 1
      %p156 = scmp.eq.s32.totalorder %s28, 3
      %p157 = scmp.ne.s32.totalorder %s152, %s154
      %p158 = scmp.eq.s32.totalorder %s28, 0
      %p159 = por %p157, %p158
      %p160 = scmp.ne.s32.totalorder %s152, %s154
      %p161 = scmp.eq.s32.totalorder %s33, 3
      %p162 = por %p160, %p161
      %p163 = scmp.ne.s32.totalorder %s154, %s155
      %p164 = scmp.eq.s32.totalorder %s33, 0
      %p165 = por %p163, %p164
      %p166 = scmp.ne.s32.totalorder %s154, %s155
      %p167 = scmp.eq.s32.totalorder %s34, 3
      %p168 = por %p166, %p167
      %p170 = scmp.ne.s32.totalorder %s155, %s169
      %p171 = scmp.eq.s32.totalorder %s34, 0
      %p172 = por %p170, %p171
      %s174 = sadd.s32 %s173, 1
      %p177 = scmp.eq.s32.totalorder %s28, 3
      %p178 = scmp.ne.s32.totalorder %s173, %s175
      %p179 = scmp.eq.s32.totalorder %s28, 0
      %p180 = por %p178, %p179
      %p181 = scmp.ne.s32.totalorder %s173, %s175
      %p182 = scmp.eq.s32.totalorder %s33, 3
      %p183 = por %p181, %p182
      %p184 = scmp.ne.s32.totalorder %s175, %s176
      %p185 = scmp.eq.s32.totalorder %s33, 0
      %p186 = por %p184, %p185
      %p187 = scmp.ne.s32.totalorder %s175, %s176
      %p188 = scmp.eq.s32.totalorder %s34, 3
      %p189 = por %p187, %p188
      %p191 = scmp.ne.s32.totalorder %s176, %s190
      %p192 = scmp.eq.s32.totalorder %s34, 0
      %p193 = por %p191, %p192
      %s195 = sadd.s32 %s194, 1
      %p198 = scmp.eq.s32.totalorder %s28, 3
      %p199 = scmp.ne.s32.totalorder %s194, %s196
      %p200 = scmp.eq.s32.totalorder %s28, 0
      %p201 = por %p199, %p200
      %p202 = scmp.ne.s32.totalorder %s194, %s196
      %p203 = scmp.eq.s32.totalorder %s33, 3
      %p204 = por %p202, %p203
      %p205 = scmp.ne.s32.totalorder %s196, %s197
      %p206 = scmp.eq.s32.totalorder %s33, 0
      %p207 = por %p205, %p206
      %p208 = scmp.ne.s32.totalorder %s196, %s197
      %p209 = scmp.eq.s32.totalorder %s34, 3
      %p210 = por %p208, %p209
      %p212 = scmp.ne.s32.totalorder %s197, %s211
      %p213 = scmp.eq.s32.totalorder %s34, 0
      %p214 = por %p212, %p213
      %s216 = sadd.s32 %s215, 1
      %p219 = scmp.eq.s32.totalorder %s28, 3
      %p220 = scmp.ne.s32.totalorder %s215, %s217
      %p221 = scmp.eq.s32.totalorder %s28, 0
      %p222 = por %p220, %p221
      %p223 = scmp.ne.s32.totalorder %s215, %s217
      %p224 = scmp.eq.s32.totalorder %s33, 3
      %p225 = por %p223, %p224
      %p226 = scmp.ne.s32.totalorder %s217, %s218
      %p227 = scmp.eq.s32.totalorder %s33, 0
      %p228 = por %p226, %p227
      %p229 = scmp.ne.s32.totalorder %s217, %s218
      %p230 = scmp.eq.s32.totalorder %s34, 3
      %p231 = por %p229, %p230
      %p233 = scmp.ne.s32.totalorder %s218, %s232
      %p234 = scmp.eq.s32.totalorder %s34, 0
      %p235 = por %p233, %p234
      %s237 = sadd.s32 %s236, 1
      %p240 = scmp.eq.s32.totalorder %s28, 3
      %p241 = scmp.ne.s32.totalorder %s236, %s238
      %p242 = scmp.eq.s32.totalorder %s28, 0
      %p243 = por %p241, %p242
      %p244 = scmp.ne.s32.totalorder %s236, %s238
      %p245 = scmp.eq.s32.totalorder %s33, 3
      %p246 = por %p244, %p245
      %p247 = scmp.ne.s32.totalorder %s238, %s239
      %p248 = scmp.eq.s32.totalorder %s33, 0
      %p249 = por %p247, %p248
      %p250 = scmp.ne.s32.totalorder %s238, %s239
      %p251 = scmp.eq.s32.totalorder %s34, 3
      %p252 = por %p250, %p251
      %p254 = scmp.ne.s32.totalorder %s239, %s253
      %p255 = scmp.eq.s32.totalorder %s34, 0
      %p256 = por %p254, %p255
      %s258 = sadd.s32 %s257, 1
      %p261 = scmp.eq.s32.totalorder %s28, 3
      %p262 = scmp.ne.s32.totalorder %s257, %s259
      %p263 = scmp.eq.s32.totalorder %s28, 0
      %p264 = por %p262, %p263
      %p265 = scmp.ne.s32.totalorder %s257, %s259
      %p266 = scmp.eq.s32.totalorder %s33, 3
      %p267 = por %p265, %p266
      %p268 = scmp.ne.s32.totalorder %s259, %s260
      %p269 = scmp.eq.s32.totalorder %s33, 0
      %p270 = por %p268, %p269
      %p271 = scmp.ne.s32.totalorder %s259, %s260
      %p272 = scmp.eq.s32.totalorder %s34, 3
      %p273 = por %p271, %p272
      %p275 = scmp.ne.s32.totalorder %s260, %s274
      %p276 = scmp.eq.s32.totalorder %s34, 0
      %p277 = por %p275, %p276
      %s279 = sadd.s32 %s278, 1
      %p282 = scmp.eq.s32.totalorder %s28, 3
      %p283 = scmp.ne.s32.totalorder %s278, %s280
      %p284 = scmp.eq.s32.totalorder %s28, 0
      %p285 = por %p283, %p284
      %p286 = scmp.ne.s32.totalorder %s278, %s280
      %p287 = scmp.eq.s32.totalorder %s33, 3
      %p288 = por %p286, %p287
      %p289 = scmp.ne.s32.totalorder %s280, %s281
      %p290 = scmp.eq.s32.totalorder %s33, 0
      %p291 = por %p289, %p290
      %p292 = scmp.ne.s32.totalorder %s280, %s281
      %p293 = scmp.eq.s32.totalorder %s34, 3
      %p294 = por %p292, %p293
      %p296 = scmp.ne.s32.totalorder %s281, %s295
      %p297 = scmp.eq.s32.totalorder %s34, 0
      %p298 = por %p296, %p297
      %s300 = sadd.s32 %s299, 1
      %p303 = scmp.eq.s32.totalorder %s28, 3
      %p304 = scmp.ne.s32.totalorder %s299, %s301
      %p305 = scmp.eq.s32.totalorder %s28, 0
      %p306 = por %p304, %p305
      %p307 = scmp.ne.s32.totalorder %s299, %s301
      %p308 = scmp.eq.s32.totalorder %s33, 3
      %p309 = por %p307, %p308
      %p310 = scmp.ne.s32.totalorder %s301, %s302
      %p311 = scmp.eq.s32.totalorder %s33, 0
      %p312 = por %p310, %p311
      %p313 = scmp.ne.s32.totalorder %s301, %s302
      %p314 = scmp.eq.s32.totalorder %s34, 3
      %p315 = por %p313, %p314
      %p317 = scmp.ne.s32.totalorder %s302, %s316
      %p318 = scmp.eq.s32.totalorder %s34, 0
      %p319 = por %p317, %p318
      %s321 = sadd.s32 %s320, 1
      %p324 = scmp.eq.s32.totalorder %s28, 3
      %p325 = scmp.ne.s32.totalorder %s320, %s322
      %p326 = scmp.eq.s32.totalorder %s28, 0
      %p327 = por %p325, %p326
      %p328 = scmp.ne.s32.totalorder %s320, %s322
      %p329 = scmp.eq.s32.totalorder %s33, 3
      %p330 = por %p328, %p329
      %p331 = scmp.ne.s32.totalorder %s322, %s323
      %p332 = scmp.eq.s32.totalorder %s33, 0
      %p333 = por %p331, %p332
      %p334 = scmp.ne.s32.totalorder %s322, %s323
      %p335 = scmp.eq.s32.totalorder %s34, 3
      %p336 = por %p334, %p335
      %p338 = scmp.ne.s32.totalorder %s323, %s337
      %p339 = scmp.eq.s32.totalorder %s34, 0
      %p340 = por %p338, %p339
      %s341 = ssub.s32 %s35, %s47
      %p342 = scmp.eq.s32.totalorder %s341, 0
      %s344 = sadd.s32 %s343, 1
      %s345 = scalar_select %p342, %s343, %s344
      %p348 = pneg %p342
      %p349 = scmp.eq.s32.totalorder %s28, 3
      %p350 = por %p348, %p349
      %p351 = scmp.ne.s32.totalorder %s343, %s346
      %p352 = scmp.eq.s32.totalorder %s28, 0
      %p353 = por %p351, %p352
      %p354 = scmp.ne.s32.totalorder %s343, %s346
      %p355 = scmp.eq.s32.totalorder %s33, 3
      %p356 = por %p354, %p355
      %p357 = scmp.ne.s32.totalorder %s346, %s347
      %p358 = scmp.eq.s32.totalorder %s33, 0
      %p359 = por %p357, %p358
      %p360 = scmp.ne.s32.totalorder %s346, %s347
      %p361 = scmp.eq.s32.totalorder %s34, 3
      %p362 = por %p360, %p361
      %p364 = scmp.ne.s32.totalorder %s347, %s363
      %p365 = scmp.eq.s32.totalorder %s34, 0
      %p366 = por %p364, %p365
      %p367 = scmp.le.s32.totalorder 1, %s28
      %p368 = scmp.lt.s32.totalorder %s28, 5
      %p369 = pnand %p367, %p368
      %p370 = pneg %p369
      // Predicated region
      $region9: #{tpu_custom_call.1} parent=5 // pred_check
        _
      $region10: #{tpu_custom_call.1} parent=5 // pred_check_branch
        %372 = sbr.rel (%p369) target = $region12
      $region11: #{tpu_custom_call.1} parent=5 // pred_region
        %s373 = ssub.s32 %s28, 1
        // Predicated region
        $region13: #{tpu_custom_call.1} parent=11 // pred_check
          %p374 = pneg %p165
        $region14: #{tpu_custom_call.1} parent=11 // pred_check_branch
          %376 = sbr.rel (%p374) target = $region16
        $region15: #{tpu_custom_call.1} parent=11 // pred_region
          _
        $region16: #{tpu_custom_call.1} parent=11 // pred_fallthru
          _
        // Predicated region
        $region17: #{tpu_custom_call.1} parent=11 // pred_check
          %p377 = pneg %p186
        $region18: #{tpu_custom_call.1} parent=11 // pred_check_branch
          %379 = sbr.rel (%p377) target = $region20
        $region19: #{tpu_custom_call.1} parent=11 // pred_region
          _
        $region20: #{tpu_custom_call.1} parent=11 // pred_fallthru
          _
        // Predicated region
        $region21: #{tpu_custom_call.1} parent=11 // pred_check
          %p380 = pneg %p207
        $region22: #{tpu_custom_call.1} parent=11 // pred_check_branch
          %382 = sbr.rel (%p380) target = $region24
        $region23: #{tpu_custom_call.1} parent=11 // pred_region
          _
        $region24: #{tpu_custom_call.1} parent=11 // pred_fallthru
          _
        // Predicated region
        $region25: #{tpu_custom_call.1} parent=11 // pred_check
          %p383 = pneg %p228
        $region26: #{tpu_custom_call.1} parent=11 // pred_check_branch
          %385 = sbr.rel (%p383) target = $region28
        $region27: #{tpu_custom_call.1} parent=11 // pred_region
          _
        $region28: #{tpu_custom_call.1} parent=11 // pred_fallthru
          _
        // Predicated region
        $region29: #{tpu_custom_call.1} parent=11 // pred_check
          %p386 = pneg %p249
        $region30: #{tpu_custom_call.1} parent=11 // pred_check_branch
          %388 = sbr.rel (%p386) target = $region32
        $region31: #{tpu_custom_call.1} parent=11 // pred_region
          _
        $region32: #{tpu_custom_call.1} parent=11 // pred_fallthru
          _
        // Predicated region
        $region33: #{tpu_custom_call.1} parent=11 // pred_check
          %p389 = pneg %p270
        $region34: #{tpu_custom_call.1} parent=11 // pred_check_branch
          %391 = sbr.rel (%p389) target = $region36
        $region35: #{tpu_custom_call.1} parent=11 // pred_region
          _
        $region36: #{tpu_custom_call.1} parent=11 // pred_fallthru
          _
        // Predicated region
        $region37: #{tpu_custom_call.1} parent=11 // pred_check
          %p392 = pneg %p291
        $region38: #{tpu_custom_call.1} parent=11 // pred_check_branch
          %394 = sbr.rel (%p392) target = $region40
        $region39: #{tpu_custom_call.1} parent=11 // pred_region
          _
        $region40: #{tpu_custom_call.1} parent=11 // pred_fallthru
          _
        // Predicated region
        $region41: #{tpu_custom_call.1} parent=11 // pred_check
          %p395 = pneg %p312
        $region42: #{tpu_custom_call.1} parent=11 // pred_check_branch
          %397 = sbr.rel (%p395) target = $region44
        $region43: #{tpu_custom_call.1} parent=11 // pred_region
          _
        $region44: #{tpu_custom_call.1} parent=11 // pred_fallthru
          _
        // Predicated region
        $region45: #{tpu_custom_call.1} parent=11 // pred_check
          %p398 = pneg %p333
        $region46: #{tpu_custom_call.1} parent=11 // pred_check_branch
          %400 = sbr.rel (%p398) target = $region48
        $region47: #{tpu_custom_call.1} parent=11 // pred_region
          _
        $region48: #{tpu_custom_call.1} parent=11 // pred_fallthru
          _
      $region12: #{tpu_custom_call.1} parent=5 // pred_fallthru
        _
      %p401 = scmp.lt.s32.totalorder %s28, 4
      // Predicated region
      $region49: #{tpu_custom_call.1} parent=5 // pred_check
        %p402 = pneg %p401
      $region50: #{tpu_custom_call.1} parent=5 // pred_check_branch
        %404 = sbr.rel (%p402) target = $region52
      $region51: #{tpu_custom_call.1} parent=5 // pred_region
        // Predicated region
        $region53: #{tpu_custom_call.1} parent=51 // pred_check
          %p405 = pneg %p60
        $region54: #{tpu_custom_call.1} parent=51 // pred_check_branch
          %407 = sbr.rel (%p405) target = $region56
        $region55: #{tpu_custom_call.1} parent=51 // pred_region
          %s408 = sand.u32 %s50, 1
          %s409 = scalar_lea.sflag [#allocation5], %s408
          %s410 = sand.u32 %s50, 1
          %s411 = smul.addr %s410, 16
          %s412 = scalar_lea.vmem [#allocation4], %s411
          %s414 = ssub.s32 256, 256
          %415 = vsyncadd %s409, %s414
          %s416 = smul.addr %s35, 2
          %s417 = smul.addr %s416, 128
          %s418 = scalar_lea.hbm %s0, %s417
          %s419 = sshll.u32 %s412, 4
          %s420 = int_to_ptr.vmem [resolvable:$true] %s419
          %425 = dma.hbm_to_vmem [thread:$0]  %s418, 256, %s420, %s409, 128, 128, 8
        $region56: #{tpu_custom_call.1} parent=51 // pred_fallthru
          _
        // Predicated region
        $region57: #{tpu_custom_call.1} parent=51 // pred_check
          %p426 = pneg %p86
        $region58: #{tpu_custom_call.1} parent=51 // pred_check_branch
          %428 = sbr.rel (%p426) target = $region60
        $region59: #{tpu_custom_call.1} parent=51 // pred_region
          %p429 = scmp.lt.s32.totalorder %s36, 1
          %s430 = scalar_select %p429, %s36, 1
          %s431 = smul.addr %s430, 48
          %s432 = smul.addr %s431, 4
          %s433 = scalar_lea.vmem %s1, %s432
        $region60: #{tpu_custom_call.1} parent=51 // pred_fallthru
          _
        // Predicated region
        $region61: #{tpu_custom_call.1} parent=51 // pred_check
          %p434 = pneg %p112
        $region62: #{tpu_custom_call.1} parent=51 // pred_check_branch
          %436 = sbr.rel (%p434) target = $region64
        $region63: #{tpu_custom_call.1} parent=51 // pred_region
          %s437 = sand.u32 %s102, 1
          %s438 = scalar_lea.sflag [#allocation8], %s437
          %s439 = sand.u32 %s102, 1
          %s440 = smul.addr %s439, 6
          %s441 = scalar_lea.vmem [#allocation7], %s440
          %s443 = ssub.s32 96, 96
          %444 = vsyncadd %s438, %s443
          %s445 = smul.addr %s36, 6
          %s446 = smul.addr %s445, 16
          %s447 = scalar_lea.hbm %s2, %s446
          %s449 = sshll.u32 %s441, 4
          %s450 = int_to_ptr.vmem [resolvable:$true] %s449
          %452 = dma.hbm_to_vmem [thread:$0]  %s447, 96, %s450, %s438
        $region64: #{tpu_custom_call.1} parent=51 // pred_fallthru
          _
        // Predicated region
        $region65: #{tpu_custom_call.1} parent=51 // pred_check
          %p453 = pneg %p138
        $region66: #{tpu_custom_call.1} parent=51 // pred_check_branch
          %455 = sbr.rel (%p453) target = $region68
        $region67: #{tpu_custom_call.1} parent=51 // pred_region
          %p456 = scmp.lt.s32.totalorder %s36, 1
          %s457 = scalar_select %p456, %s36, 1
          %s458 = smul.addr %s457, 32
          %s459 = smul.addr %s458, 4
          %s460 = scalar_lea.vmem %s3, %s459
        $region68: #{tpu_custom_call.1} parent=51 // pred_fallthru
          _
      $region52: #{tpu_custom_call.1} parent=5 // pred_fallthru
        _
      %p461 = scmp.le.s32.totalorder 1, %s28
      %p462 = scmp.lt.s32.totalorder %s28, 5
      %p463 = pnand %p461, %p462
      %p464 = pneg %p463
      // Predicated region
      $region69: #{tpu_custom_call.1} parent=5 // pred_check
        _
      $region70: #{tpu_custom_call.1} parent=5 // pred_check_branch
        %466 = sbr.rel (%p463) target = $region72
      $region71: #{tpu_custom_call.1} parent=5 // pred_region
        %s467 = ssub.s32 %s28, 1
        %s468 = sand.u32 %s53, 1
        %s469 = scalar_lea.sflag [#allocation5], %s468
        %s470 = sand.u32 %s53, 1
        %s471 = smul.addr %s470, 16
        %s472 = scalar_lea.vmem [#allocation4], %s471
        // Predicated region
        $region73: #{tpu_custom_call.1} parent=71 // pred_check
          %p473 = pneg %p66
        $region74: #{tpu_custom_call.1} parent=71 // pred_check_branch
          %475 = sbr.rel (%p473) target = $region76
        $region75: #{tpu_custom_call.1} parent=71 // pred_region
          %476 = dma.done %s469, 256
        $region76: #{tpu_custom_call.1} parent=71 // pred_fallthru
          _
        %s477 = sand.u32 %s105, 1
        %s478 = scalar_lea.sflag [#allocation8], %s477
        %s479 = sand.u32 %s105, 1
        %s480 = smul.addr %s479, 6
        %s481 = scalar_lea.vmem [#allocation7], %s480
        // Predicated region
        $region77: #{tpu_custom_call.1} parent=71 // pred_check
          %p482 = pneg %p118
        $region78: #{tpu_custom_call.1} parent=71 // pred_check_branch
          %484 = sbr.rel (%p482) target = $region80
        $region79: #{tpu_custom_call.1} parent=71 // pred_region
          %485 = dma.done %s478, 96
        $region80: #{tpu_custom_call.1} parent=71 // pred_fallthru
          _
        %s486 = sand.u32 %s53, 1
        %s487 = scalar_lea.sflag [#allocation5], %s486
        %s488 = sand.u32 %s53, 1
        %s489 = smul.addr %s488, 16
        %s490 = scalar_lea.vmem [#allocation4], %s489
        %p491 = pneg %p66
        %p492 = pneg %p63
        %p493 = scmp.lt.s32.totalorder %s38, 1
        %s494 = scalar_select %p493, %s38, 1
        %s495 = smul.addr %s494, 48
        %s496 = smul.addr %s495, 4
        %s497 = scalar_lea.vmem %s1, %s496
        %p498 = pneg %p92
        %p499 = pneg %p89
        %s500 = sand.u32 %s105, 1
        %s501 = scalar_lea.sflag [#allocation8], %s500
        %s502 = sand.u32 %s105, 1
        %s503 = smul.addr %s502, 6
        %s504 = scalar_lea.vmem [#allocation7], %s503
        %p505 = pneg %p118
        %p506 = pneg %p115
        %p507 = scmp.lt.s32.totalorder %s38, 1
        %s508 = scalar_select %p507, %s38, 1
        %s509 = smul.addr %s508, 32
        %s510 = smul.addr %s509, 4
        %s511 = scalar_lea.vmem %s3, %s510
        %p512 = pneg %p144
        %p513 = pneg %p141
        %p514 = pneg %p165
        %p515 = pneg %p162
        %p516 = pneg %p186
        %p517 = pneg %p183
        %p518 = pneg %p207
        %p519 = pneg %p204
        %p520 = pneg %p228
        %p521 = pneg %p225
        %p522 = pneg %p249
        %p523 = pneg %p246
        %p524 = pneg %p270
        %p525 = pneg %p267
        %p526 = pneg %p291
        %p527 = pneg %p288
        %p528 = pneg %p312
        %p529 = pneg %p309
        %p530 = pneg %p333
        %p531 = pneg %p330
        %p532 = pneg %p359
        %p533 = pneg %p356
        %s534 = sand.u32 %s346, 1
        %s535 = scalar_lea.sflag [#allocation6], %s534
        %s536 = sand.u32 %s346, 1
        %s537 = smul.addr %s536, 16
        %s538 = scalar_lea.vmem [#allocation9], %s537
        %p539 = scmp.lt.s32.totalorder %s38, 1
        %s540 = scalar_select %p539, %s38, 1
        %s541 = smul.addr %s540, 48
        %s542 = smul.addr %s541, 4
        %s543 = scalar_lea.vmem %s1, %s542
        %p544 = scmp.lt.s32.totalorder %s38, 1
        %s545 = scalar_select %p544, %s38, 1
        %s546 = smul.addr %s545, 32
        %s547 = smul.addr %s546, 4
        %s548 = scalar_lea.vmem %s3, %s547
        %p550 = scmp.eq.s32.totalorder %s38, 0
        // Predicated region
        $region81: #{tpu_custom_call.1} parent=71 // pred_check
          %p551 = pneg %p550
        $region82: #{tpu_custom_call.1} parent=71 // pred_check_branch
          %553 = sbr.rel (%p551) target = $region84
        $region83: #{tpu_custom_call.1} parent=71 // pred_region
          %vm554 = vcmask 523264
          %555 = vst.msk [vmem:[#allocation2] sm:$0xff] %vm554, 0.0
          %556 = vst.msk [vmem:[#allocation2 + $0x8] sm:$0xff] %vm554, 0.0
          %v557 = vld [vmem:[%s472] sm:$0xff]
          %v558 = vld [vmem:[%s472 + $0x8] sm:$0xff]
          %v559 = vpack.c.bf16 %v558, %v557
          %v561 = vunpack.c.l.b16 %v559
          %v562 = vunpack.c.h.b16 %v559
          %v563 = vpack.c.b16 %v561, %v561
          %v564 = vpack.c.b16 %v562, %v562
          %vm567 = vcmask 519168
          %568 = vst.msk [vmem:[#allocation3] sm:$0xf] %vm567, %v563
          %569 = vst.msk [vmem:[#allocation3 + $0x4] sm:$0xf] %vm567, %v564
        $region84: #{tpu_custom_call.1} parent=71 // pred_fallthru
          _
        %v570 = vld [vmem:[#allocation3] sm:$0xf]
        %v571 = vld [vmem:[#allocation3 + $0x4] sm:$0xf]
        %v572 = vld [vmem:[%s543] sm:$0xff]
        %v573 = vld [vmem:[%s543 + $0x8] sm:$0xff]
        %v574 = vld [vmem:[%s543 + $0x10] sm:$0xff]
        %v575 = vld [vmem:[%s543 + $0x18] sm:$0xff]
        %v576 = vld [vmem:[%s543 + $0x20] sm:$0xff]
        %v577 = vld [vmem:[%s543 + $0x28] sm:$0xff]
        %v578 = vld [vmem:[%s543 + $0x30] sm:$0xff]
        %v579 = vld [vmem:[%s543 + $0x38] sm:$0xff]
        %v580 = vld [vmem:[%s543 + $0x40] sm:$0xff]
        %v581 = vld [vmem:[%s543 + $0x48] sm:$0xff]
        %v582 = vld [vmem:[%s543 + $0x50] sm:$0xff]
        %v583 = vld [vmem:[%s543 + $0x58] sm:$0xff]
        %v584 = vld [vmem:[%s543 + $0x60] sm:$0xff]
        %v585 = vld [vmem:[%s543 + $0x68] sm:$0xff]
        %v586 = vld [vmem:[%s543 + $0x70] sm:$0xff]
        %v587 = vld [vmem:[%s543 + $0x78] sm:$0xff]
        %v588 = vld [vmem:[%s543 + $0x80] sm:$0xff]
        %v589 = vld [vmem:[%s543 + $0x88] sm:$0xff]
        %v590 = vld [vmem:[%s543 + $0x90] sm:$0xff]
        %v591 = vld [vmem:[%s543 + $0x98] sm:$0xff]
        %v592 = vld [vmem:[%s543 + $0xa0] sm:$0xff]
        %v593 = vld [vmem:[%s543 + $0xa8] sm:$0xff]
        %v594 = vld [vmem:[%s543 + $0xb0] sm:$0xff]
        %v595 = vld [vmem:[%s543 + $0xb8] sm:$0xff]
        %v596 = vld [vmem:[%s481] sm:$0x3f]
        %v598 = vlaneseq
        %v599 = vshrl.u32 %v598, 7
        %v600 = vsub.s32 0, %v599
        %v601 = vrot.slane %v596, %v600
        %v602 = vlaneseq
        %v603 = vshrl.u32 %v602, 7
        %v604 = vsub.s32 1, %v603
        %v605 = vrot.slane %v596, %v604
        %v606 = vlaneseq
        %v607 = vshrl.u32 %v606, 7
        %v608 = vsub.s32 2, %v607
        %v609 = vrot.slane %v596, %v608
        %v610 = vlaneseq
        %v611 = vshrl.u32 %v610, 7
        %v612 = vsub.s32 3, %v611
        %v613 = vrot.slane %v596, %v612
        %v614 = vlaneseq
        %v615 = vshrl.u32 %v614, 7
        %v616 = vsub.s32 4, %v615
        %v617 = vrot.slane %v596, %v616
        %v618 = vlaneseq
        %v619 = vshrl.u32 %v618, 7
        %v620 = vsub.s32 5, %v619
        %v621 = vrot.slane %v596, %v620
        %v630 = vunpack.c.l.b16 %v570
        %v631 = vunpack.c.l.b16 %v571
        %v632 = vpack.c.b16 %v631, %v630
        %v657 = vunpack.c.l.b16 %v572
        %v658 = vunpack.c.h.b16 %v572
        %v659 = vunpack.c.l.b16 %v573
        %v660 = vunpack.c.h.b16 %v573
        %v661 = vunpack.c.l.b16 %v574
        %v662 = vunpack.c.h.b16 %v574
        %v663 = vunpack.c.l.b16 %v575
        %v664 = vunpack.c.h.b16 %v575
        %v665 = vunpack.c.l.b16 %v576
        %v666 = vunpack.c.h.b16 %v576
        %v667 = vunpack.c.l.b16 %v577
        %v668 = vunpack.c.h.b16 %v577
        %v669 = vunpack.c.l.b16 %v578
        %v670 = vunpack.c.h.b16 %v578
        %v671 = vunpack.c.l.b16 %v579
        %v672 = vunpack.c.h.b16 %v579
        %v673 = vunpack.c.l.b16 %v580
        %v674 = vunpack.c.h.b16 %v580
        %v675 = vunpack.c.l.b16 %v581
        %v676 = vunpack.c.h.b16 %v581
        %v677 = vunpack.c.l.b16 %v582
        %v678 = vunpack.c.h.b16 %v582
        %v679 = vunpack.c.l.b16 %v583
        %v680 = vunpack.c.h.b16 %v583
        %v681 = vunpack.c.l.b16 %v584
        %v682 = vunpack.c.h.b16 %v584
        %v683 = vunpack.c.l.b16 %v585
        %v684 = vunpack.c.h.b16 %v585
        %v685 = vunpack.c.l.b16 %v586
        %v686 = vunpack.c.h.b16 %v586
        %v687 = vunpack.c.l.b16 %v587
        %v688 = vunpack.c.h.b16 %v587
        %v689 = vunpack.c.l.b16 %v588
        %v690 = vunpack.c.h.b16 %v588
        %v691 = vunpack.c.l.b16 %v589
        %v692 = vunpack.c.h.b16 %v589
        %v693 = vunpack.c.l.b16 %v590
        %v694 = vunpack.c.h.b16 %v590
        %v695 = vunpack.c.l.b16 %v591
        %v696 = vunpack.c.h.b16 %v591
        %v697 = vunpack.c.l.b16 %v592
        %v698 = vunpack.c.h.b16 %v592
        %v699 = vunpack.c.l.b16 %v593
        %v700 = vunpack.c.h.b16 %v593
        %v701 = vunpack.c.l.b16 %v594
        %v702 = vunpack.c.h.b16 %v594
        %v703 = vunpack.c.l.b16 %v595
        %v704 = vunpack.c.h.b16 %v595
        %v705 = vpack.c.b16 %v663, %v657
        %v706 = vpack.c.b16 %v664, %v658
        %v707 = vpack.c.b16 %v665, %v659
        %v708 = vpack.c.b16 %v666, %v660
        %v709 = vpack.c.b16 %v667, %v661
        %v710 = vpack.c.b16 %v668, %v662
        %v711 = vpack.c.b16 %v675, %v669
        %v712 = vpack.c.b16 %v676, %v670
        %v713 = vpack.c.b16 %v677, %v671
        %v714 = vpack.c.b16 %v678, %v672
        %v715 = vpack.c.b16 %v679, %v673
        %v716 = vpack.c.b16 %v680, %v674
        %v717 = vpack.c.b16 %v687, %v681
        %v718 = vpack.c.b16 %v688, %v682
        %v719 = vpack.c.b16 %v689, %v683
        %v720 = vpack.c.b16 %v690, %v684
        %v721 = vpack.c.b16 %v691, %v685
        %v722 = vpack.c.b16 %v692, %v686
        %v723 = vpack.c.b16 %v699, %v693
        %v724 = vpack.c.b16 %v700, %v694
        %v725 = vpack.c.b16 %v701, %v695
        %v726 = vpack.c.b16 %v702, %v696
        %v727 = vpack.c.b16 %v703, %v697
        %v728 = vpack.c.b16 %v704, %v698
        %vm753 = vcmask 523264
        %v755 = vsel %vm753, %v632, 0
        %757 = vmatprep.subr.bf16.mxu0 0
        %758 = vmatpush1.bf16.msra.mxu0 0
        %759 = vmatprep.subr.bf16.mxu0 0
        %760 = vmatpush1.bf16.msra.mxu0 0
        %761 = vmatprep.subr.bf16.mxu0 0
        %762 = vmatpush1.bf16.msra.mxu0 0
        %763 = vmatprep.subr.bf16.mxu0 0
        %764 = vmatpush1.bf16.msra.mxu0 0
        %765 = vmatprep.subr.bf16.mxu0 %v724
        %766 = vmatpush1.bf16.msra.mxu0 %v723
        %767 = vmatprep.subr.bf16.mxu0 %v718
        %768 = vmatpush1.bf16.msra.mxu0 %v717
        %769 = vmatprep.subr.bf16.mxu0 %v712
        %770 = vmatpush1.bf16.msra.mxu0 %v711
        %771 = vmatprep.subr.bf16.mxu0 %v706
        %772 = vmatpush1.bf16.msra.mxu0 %v705
        %773 = vmatprep.subr.bf16.mxu0 0
        %774 = vmatpush2.bf16.msra.mxu0 0
        %775 = vmatprep.subr.bf16.mxu0 0
        %776 = vmatpush2.bf16.msra.mxu0 0
        %777 = vmatprep.subr.bf16.mxu0 0
        %778 = vmatpush2.bf16.msra.mxu0 0
        %779 = vmatprep.subr.bf16.mxu0 0
        %780 = vmatpush2.bf16.msra.mxu0 0
        %781 = vmatprep.subr.bf16.mxu0 0
        %782 = vmatpush2.bf16.msra.mxu0 0
        %783 = vmatprep.subr.bf16.mxu0 0
        %784 = vmatpush2.bf16.msra.mxu0 0
        %785 = vmatprep.subr.bf16.mxu0 0
        %786 = vmatpush2.bf16.msra.mxu0 0
        %787 = vmatprep.subr.bf16.mxu0 0
        %788 = vmatpush2.bf16.msra.mxu0 0
        %789 = vmatprep.mubr.bf16.mxu0 0
        %790 = vmatmul.mubr.bf16.gmra.mxu0 %v755
        %v791 = vpop.f32.mrf.mxu0
        %v792 = vadd.f32 %v601, %v791
        %v793 = vpop.f32.mrf.mxu0
        %v794 = vadd.f32 %v605, %v793
        %v795 = vpop.f32.mrf.mxu0
        %v796 = vadd.f32 %v601, %v795
        %v797 = vpop.f32.mrf.mxu0
        %v798 = vadd.f32 %v605, %v797
        %799 = vdwg.mxu0
        %800 = vmatprep.subr.bf16.mxu0 0
        %801 = vmatpush1.bf16.msra.mxu0 0
        %802 = vmatprep.subr.bf16.mxu0 0
        %803 = vmatpush1.bf16.msra.mxu0 0
        %804 = vmatprep.subr.bf16.mxu0 0
        %805 = vmatpush1.bf16.msra.mxu0 0
        %806 = vmatprep.subr.bf16.mxu0 0
        %807 = vmatpush1.bf16.msra.mxu0 0
        %808 = vmatprep.subr.bf16.mxu0 %v726
        %809 = vmatpush1.bf16.msra.mxu0 %v725
        %810 = vmatprep.subr.bf16.mxu0 %v720
        %811 = vmatpush1.bf16.msra.mxu0 %v719
        %812 = vmatprep.subr.bf16.mxu0 %v714
        %813 = vmatpush1.bf16.msra.mxu0 %v713
        %814 = vmatprep.subr.bf16.mxu0 %v708
        %815 = vmatpush1.bf16.msra.mxu0 %v707
        %816 = vmatprep.subr.bf16.mxu0 0
        %817 = vmatpush2.bf16.msra.mxu0 0
        %818 = vmatprep.subr.bf16.mxu0 0
        %819 = vmatpush2.bf16.msra.mxu0 0
        %820 = vmatprep.subr.bf16.mxu0 0
        %821 = vmatpush2.bf16.msra.mxu0 0
        %822 = vmatprep.subr.bf16.mxu0 0
        %823 = vmatpush2.bf16.msra.mxu0 0
        %824 = vmatprep.subr.bf16.mxu0 0
        %825 = vmatpush2.bf16.msra.mxu0 0
        %826 = vmatprep.subr.bf16.mxu0 0
        %827 = vmatpush2.bf16.msra.mxu0 0
        %828 = vmatprep.subr.bf16.mxu0 0
        %829 = vmatpush2.bf16.msra.mxu0 0
        %830 = vmatprep.subr.bf16.mxu0 0
        %831 = vmatpush2.bf16.msra.mxu0 0
        %832 = vmatprep.mubr.bf16.mxu0 0
        %833 = vmatmul.mubr.bf16.gmra.mxu0 %v755
        %v834 = vpop.f32.mrf.mxu0
        %v835 = vadd.f32 %v609, %v834
        %v836 = vpop.f32.mrf.mxu0
        %v837 = vadd.f32 %v613, %v836
        %v838 = vpop.f32.mrf.mxu0
        %v839 = vadd.f32 %v609, %v838
        %v840 = vpop.f32.mrf.mxu0
        %v841 = vadd.f32 %v613, %v840
        %842 = vdwg.mxu0
        %843 = vmatprep.subr.bf16.mxu0 0
        %844 = vmatpush1.bf16.msra.mxu0 0
        %845 = vmatprep.subr.bf16.mxu0 0
        %846 = vmatpush1.bf16.msra.mxu0 0
        %847 = vmatprep.subr.bf16.mxu0 0
        %848 = vmatpush1.bf16.msra.mxu0 0
        %849 = vmatprep.subr.bf16.mxu0 0
        %850 = vmatpush1.bf16.msra.mxu0 0
        %851 = vmatprep.subr.bf16.mxu0 %v728
        %852 = vmatpush1.bf16.msra.mxu0 %v727
        %853 = vmatprep.subr.bf16.mxu0 %v722
        %854 = vmatpush1.bf16.msra.mxu0 %v721
        %855 = vmatprep.subr.bf16.mxu0 %v716
        %856 = vmatpush1.bf16.msra.mxu0 %v715
        %857 = vmatprep.subr.bf16.mxu0 %v710
        %858 = vmatpush1.bf16.msra.mxu0 %v709
        %859 = vmatprep.subr.bf16.mxu0 0
        %860 = vmatpush2.bf16.msra.mxu0 0
        %861 = vmatprep.subr.bf16.mxu0 0
        %862 = vmatpush2.bf16.msra.mxu0 0
        %863 = vmatprep.subr.bf16.mxu0 0
        %864 = vmatpush2.bf16.msra.mxu0 0
        %865 = vmatprep.subr.bf16.mxu0 0
        %866 = vmatpush2.bf16.msra.mxu0 0
        %867 = vmatprep.subr.bf16.mxu0 0
        %868 = vmatpush2.bf16.msra.mxu0 0
        %869 = vmatprep.subr.bf16.mxu0 0
        %870 = vmatpush2.bf16.msra.mxu0 0
        %871 = vmatprep.subr.bf16.mxu0 0
        %872 = vmatpush2.bf16.msra.mxu0 0
        %873 = vmatprep.subr.bf16.mxu0 0
        %874 = vmatpush2.bf16.msra.mxu0 0
        %875 = vmatprep.mubr.bf16.mxu0 0
        %876 = vmatmul.mubr.bf16.gmra.mxu0 %v755
        %v877 = vpop.f32.mrf.mxu0
        %v878 = vadd.f32 %v617, %v877
        %v879 = vpop.f32.mrf.mxu0
        %v880 = vadd.f32 %v621, %v879
        %v881 = vpop.f32.mrf.mxu0
        %v882 = vadd.f32 %v617, %v881
        %v883 = vpop.f32.mrf.mxu0
        %v884 = vadd.f32 %v621, %v883
        %885 = vdwg.mxu0
        %v886 = vpack.c.bf16 %v796, %v792
        %v887 = vpack.c.bf16 %v839, %v835
        %v888 = vpack.c.bf16 %v882, %v878
        %889 = vmatprep.subr.bf16.mxu0 0
        %890 = vmatpush1.bf16.xpose.msra.mxu0 0
        %891 = vmatprep.subr.bf16.mxu0 0
        %892 = vmatpush1.bf16.xpose.msra.mxu0 0
        %893 = vmatprep.subr.bf16.mxu0 0
        %894 = vmatpush1.bf16.xpose.msra.mxu0 0
        %895 = vmatprep.subr.bf16.mxu0 0
        %896 = vmatpush1.bf16.xpose.msra.mxu0 0
        %897 = vmatprep.subr.bf16.mxu0 0
        %898 = vmatpush1.bf16.xpose.msra.mxu0 0
        %899 = vmatprep.subr.bf16.mxu0 0
        %900 = vmatpush1.bf16.xpose.msra.mxu0 0
        %901 = vmatprep.subr.bf16.mxu0 0
        %902 = vmatpush1.bf16.xpose.msra.mxu0 0
        %903 = vmatprep.subr.bf16.mxu0 0
        %904 = vmatpush1.bf16.xpose.msra.mxu0 %v887
        %905 = vmatprep.subr.bf16.mxu0 0
        %906 = vmatpush2.bf16.xpose.msra.mxu0 0
        %907 = vmatprep.subr.bf16.mxu0 0
        %908 = vmatpush2.bf16.xpose.msra.mxu0 0
        %909 = vmatprep.subr.bf16.mxu0 0
        %910 = vmatpush2.bf16.xpose.msra.mxu0 0
        %911 = vmatprep.subr.bf16.mxu0 0
        %912 = vmatpush2.bf16.xpose.msra.mxu0 0
        %913 = vmatprep.subr.bf16.mxu0 0
        %914 = vmatpush2.bf16.xpose.msra.mxu0 0
        %915 = vmatprep.subr.bf16.mxu0 0
        %916 = vmatpush2.bf16.xpose.msra.mxu0 0
        %917 = vmatprep.subr.bf16.mxu0 0
        %918 = vmatpush2.bf16.xpose.msra.mxu0 0
        %919 = vmatprep.subr.bf16.mxu0 0
        %920 = vmatpush2.bf16.xpose.msra.mxu0 0
        %921 = vmatprep.mubr.bf16.mxu0 0
        %922 = vmatmul.mubr.bf16.gmra.mxu0 %v886
        %v923 = vpop.f32.mrf.mxu0
        %v924 = vadd.f32 0.0, %v923
        %v925 = vpop.f32.mrf.mxu0
        %v926 = vpop.f32.mrf.mxu0
        %v927 = vadd.f32 0.0, %v926
        %v928 = vpop.f32.mrf.mxu0
        %929 = vdwg.mxu0
        %vm930 = vcmask 130048
        %v931 = vsel %vm930, %v924, -inf
        %932 = vmax.xlane.f32.xlu0 %v931
        %v933 = vpop.xlane.xlu0 %932
        %v934 = vsel %vm930, %v927, -inf
        %935 = vmax.xlane.f32.xlu0 %v934
        %v936 = vpop.xlane.xlu0 %935
        %v937 = vsub.f32 %v924, %v933
        %v938 = vsub.f32 %v927, %v936
        %v939 = vmul.f32 %v937, 1.442695
        %v940 = vpow.pop %v939
        %v941 = vmul.f32 %v938, 1.442695
        %v942 = vpow.pop %v941
        %v943 = vsel %vm930, %v940, 0.0
        %944 = vadd.xlane.f32.xlu0 %v943
        %v945 = vpop.xlane.xlu0 %944
        %v946 = vsel %vm930, %v942, 0.0
        %947 = vadd.xlane.f32.xlu0 %v946
        %v948 = vpop.xlane.xlu0 %947
        %v949 = vrcp.pop %v945
        %v950 = vrcp.pop %v948
        %v951 = vmul.f32 %v940, %v949
        %v952 = vmul.f32 %v942, %v950
        %v953 = vpack.c.bf16 %v952, %v951
        %v955 = vsel %vm930, %v953, 0
        %957 = vmatprep.subr.bf16.mxu0 0
        %958 = vmatpush1.bf16.msra.mxu0 0
        %959 = vmatprep.subr.bf16.mxu0 0
        %960 = vmatpush1.bf16.msra.mxu0 0
        %961 = vmatprep.subr.bf16.mxu0 0
        %962 = vmatpush1.bf16.msra.mxu0 0
        %963 = vmatprep.subr.bf16.mxu0 0
        %964 = vmatpush1.bf16.msra.mxu0 0
        %965 = vmatprep.subr.bf16.mxu0 0
        %966 = vmatpush1.bf16.msra.mxu0 0
        %967 = vmatprep.subr.bf16.mxu0 0
        %968 = vmatpush1.bf16.msra.mxu0 0
        %969 = vmatprep.subr.bf16.mxu0 0
        %970 = vmatpush1.bf16.msra.mxu0 0
        %971 = vmatprep.subr.bf16.mxu0 0
        %972 = vmatpush1.bf16.msra.mxu0 %v888
        %973 = vmatprep.subr.bf16.mxu0 0
        %974 = vmatpush2.bf16.msra.mxu0 0
        %975 = vmatprep.subr.bf16.mxu0 0
        %976 = vmatpush2.bf16.msra.mxu0 0
        %977 = vmatprep.subr.bf16.mxu0 0
        %978 = vmatpush2.bf16.msra.mxu0 0
        %979 = vmatprep.subr.bf16.mxu0 0
        %980 = vmatpush2.bf16.msra.mxu0 0
        %981 = vmatprep.subr.bf16.mxu0 0
        %982 = vmatpush2.bf16.msra.mxu0 0
        %983 = vmatprep.subr.bf16.mxu0 0
        %984 = vmatpush2.bf16.msra.mxu0 0
        %985 = vmatprep.subr.bf16.mxu0 0
        %986 = vmatpush2.bf16.msra.mxu0 0
        %987 = vmatprep.subr.bf16.mxu0 0
        %988 = vmatpush2.bf16.msra.mxu0 0
        %989 = vmatprep.mubr.bf16.mxu0 0
        %990 = vmatmul.mubr.bf16.gmra.mxu0 %v955
        %v991 = vpop.f32.mrf.mxu0
        %v992 = vadd.f32 0.0, %v991
        %v993 = vpop.f32.mrf.mxu0
        %v994 = vpop.f32.mrf.mxu0
        %v995 = vadd.f32 0.0, %v994
        %v996 = vpop.f32.mrf.mxu0
        %997 = vdwg.mxu0
        %v998 = vpack.c.bf16 %v995, %v992
        %v999 = vpack.c.bf16 %v798, %v794
        %v1000 = vpack.c.bf16 %v841, %v837
        %v1001 = vpack.c.bf16 %v884, %v880
        %1002 = vmatprep.subr.bf16.mxu0 0
        %1003 = vmatpush1.bf16.xpose.msra.mxu0 0
        %1004 = vmatprep.subr.bf16.mxu0 0
        %1005 = vmatpush1.bf16.xpose.msra.mxu0 0
        %1006 = vmatprep.subr.bf16.mxu0 0
        %1007 = vmatpush1.bf16.xpose.msra.mxu0 0
        %1008 = vmatprep.subr.bf16.mxu0 0
        %1009 = vmatpush1.bf16.xpose.msra.mxu0 0
        %1010 = vmatprep.subr.bf16.mxu0 0
        %1011 = vmatpush1.bf16.xpose.msra.mxu0 0
        %1012 = vmatprep.subr.bf16.mxu0 0
        %1013 = vmatpush1.bf16.xpose.msra.mxu0 0
        %1014 = vmatprep.subr.bf16.mxu0 0
        %1015 = vmatpush1.bf16.xpose.msra.mxu0 0
        %1016 = vmatprep.subr.bf16.mxu0 0
        %1017 = vmatpush1.bf16.xpose.msra.mxu0 %v1000
        %1018 = vmatprep.subr.bf16.mxu0 0
        %1019 = vmatpush2.bf16.xpose.msra.mxu0 0
        %1020 = vmatprep.subr.bf16.mxu0 0
        %1021 = vmatpush2.bf16.xpose.msra.mxu0 0
        %1022 = vmatprep.subr.bf16.mxu0 0
        %1023 = vmatpush2.bf16.xpose.msra.mxu0 0
        %1024 = vmatprep.subr.bf16.mxu0 0
        %1025 = vmatpush2.bf16.xpose.msra.mxu0 0
        %1026 = vmatprep.subr.bf16.mxu0 0
        %1027 = vmatpush2.bf16.xpose.msra.mxu0 0
        %1028 = vmatprep.subr.bf16.mxu0 0
        %1029 = vmatpush2.bf16.xpose.msra.mxu0 0
        %1030 = vmatprep.subr.bf16.mxu0 0
        %1031 = vmatpush2.bf16.xpose.msra.mxu0 0
        %1032 = vmatprep.subr.bf16.mxu0 0
        %1033 = vmatpush2.bf16.xpose.msra.mxu0 0
        %1034 = vmatprep.mubr.bf16.mxu0 0
        %1035 = vmatmul.mubr.bf16.gmra.mxu0 %v999
        %v1036 = vpop.f32.mrf.mxu0
        %v1037 = vadd.f32 0.0, %v1036
        %v1038 = vpop.f32.mrf.mxu0
        %v1039 = vpop.f32.mrf.mxu0
        %v1040 = vadd.f32 0.0, %v1039
        %v1041 = vpop.f32.mrf.mxu0
        %1042 = vdwg.mxu0
        %v1043 = vsel %vm930, %v1037, -inf
        %1044 = vmax.xlane.f32.xlu0 %v1043
        %v1045 = vpop.xlane.xlu0 %1044
        %v1046 = vsel %vm930, %v1040, -inf
        %1047 = vmax.xlane.f32.xlu0 %v1046
        %v1048 = vpop.xlane.xlu0 %1047
        %v1049 = vsub.f32 %v1037, %v1045
        %v1050 = vsub.f32 %v1040, %v1048
        %v1051 = vmul.f32 %v1049, 1.442695
        %v1052 = vpow.pop %v1051
        %v1053 = vmul.f32 %v1050, 1.442695
        %v1054 = vpow.pop %v1053
        %v1055 = vsel %vm930, %v1052, 0.0
        %1056 = vadd.xlane.f32.xlu0 %v1055
        %v1057 = vpop.xlane.xlu0 %1056
        %v1058 = vsel %vm930, %v1054, 0.0
        %1059 = vadd.xlane.f32.xlu0 %v1058
        %v1060 = vpop.xlane.xlu0 %1059
        %v1061 = vrcp.pop %v1057
        %v1062 = vrcp.pop %v1060
        %v1063 = vmul.f32 %v1052, %v1061
        %v1064 = vmul.f32 %v1054, %v1062
        %v1065 = vpack.c.bf16 %v1064, %v1063
        %v1067 = vsel %vm930, %v1065, 0
        %1069 = vmatprep.subr.bf16.mxu0 0
        %1070 = vmatpush1.bf16.msra.mxu0 0
        %1071 = vmatprep.subr.bf16.mxu0 0
        %1072 = vmatpush1.bf16.msra.mxu0 0
        %1073 = vmatprep.subr.bf16.mxu0 0
        %1074 = vmatpush1.bf16.msra.mxu0 0
        %1075 = vmatprep.subr.bf16.mxu0 0
        %1076 = vmatpush1.bf16.msra.mxu0 0
        %1077 = vmatprep.subr.bf16.mxu0 0
        %1078 = vmatpush1.bf16.msra.mxu0 0
        %1079 = vmatprep.subr.bf16.mxu0 0
        %1080 = vmatpush1.bf16.msra.mxu0 0
        %1081 = vmatprep.subr.bf16.mxu0 0
        %1082 = vmatpush1.bf16.msra.mxu0 0
        %1083 = vmatprep.subr.bf16.mxu0 0
        %1084 = vmatpush1.bf16.msra.mxu0 %v1001
        %1085 = vmatprep.subr.bf16.mxu0 0
        %1086 = vmatpush2.bf16.msra.mxu0 0
        %1087 = vmatprep.subr.bf16.mxu0 0
        %1088 = vmatpush2.bf16.msra.mxu0 0
        %1089 = vmatprep.subr.bf16.mxu0 0
        %1090 = vmatpush2.bf16.msra.mxu0 0
        %1091 = vmatprep.subr.bf16.mxu0 0
        %1092 = vmatpush2.bf16.msra.mxu0 0
        %1093 = vmatprep.subr.bf16.mxu0 0
        %1094 = vmatpush2.bf16.msra.mxu0 0
        %1095 = vmatprep.subr.bf16.mxu0 0
        %1096 = vmatpush2.bf16.msra.mxu0 0
        %1097 = vmatprep.subr.bf16.mxu0 0
        %1098 = vmatpush2.bf16.msra.mxu0 0
        %1099 = vmatprep.subr.bf16.mxu0 0
        %1100 = vmatpush2.bf16.msra.mxu0 0
        %1101 = vmatprep.mubr.bf16.mxu0 0
        %1102 = vmatmul.mubr.bf16.gmra.mxu0 %v1067
        %v1103 = vpop.f32.mrf.mxu0
        %v1104 = vadd.f32 0.0, %v1103
        %v1105 = vpop.f32.mrf.mxu0
        %v1106 = vpop.f32.mrf.mxu0
        %v1107 = vadd.f32 0.0, %v1106
        %v1108 = vpop.f32.mrf.mxu0
        %1109 = vdwg.mxu0
        %v1110 = vpack.c.bf16 %v1107, %v1104
        %v1111 = vld [vmem:[#allocation2] sm:$0xff]
        %v1112 = vld [vmem:[#allocation2 + $0x8] sm:$0xff]
        %v1113 = vld [vmem:[%s548] sm:$0xf]
        %v1114 = vld [vmem:[%s548 + $0x4] sm:$0xf]
        %v1115 = vld [vmem:[%s548 + $0x8] sm:$0xf]
        %v1116 = vld [vmem:[%s548 + $0xc] sm:$0xf]
        %v1117 = vld [vmem:[%s548 + $0x10] sm:$0xf]
        %v1118 = vld [vmem:[%s548 + $0x14] sm:$0xf]
        %v1119 = vld [vmem:[%s548 + $0x18] sm:$0xf]
        %v1120 = vld [vmem:[%s548 + $0x1c] sm:$0xf]
        %v1121 = vld [vmem:[%s548 + $0x20] sm:$0xf]
        %v1122 = vld [vmem:[%s548 + $0x24] sm:$0xf]
        %v1123 = vld [vmem:[%s548 + $0x28] sm:$0xf]
        %v1124 = vld [vmem:[%s548 + $0x2c] sm:$0xf]
        %v1125 = vld [vmem:[%s548 + $0x30] sm:$0xf]
        %v1126 = vld [vmem:[%s548 + $0x34] sm:$0xf]
        %v1127 = vld [vmem:[%s548 + $0x38] sm:$0xf]
        %v1128 = vld [vmem:[%s548 + $0x3c] sm:$0xf]
        %v1129 = vld [vmem:[%s548 + $0x40] sm:$0xf]
        %v1130 = vld [vmem:[%s548 + $0x44] sm:$0xf]
        %v1131 = vld [vmem:[%s548 + $0x48] sm:$0xf]
        %v1132 = vld [vmem:[%s548 + $0x4c] sm:$0xf]
        %v1133 = vld [vmem:[%s548 + $0x50] sm:$0xf]
        %v1134 = vld [vmem:[%s548 + $0x54] sm:$0xf]
        %v1135 = vld [vmem:[%s548 + $0x58] sm:$0xf]
        %v1136 = vld [vmem:[%s548 + $0x5c] sm:$0xf]
        %v1137 = vld [vmem:[%s548 + $0x60] sm:$0xf]
        %v1138 = vld [vmem:[%s548 + $0x64] sm:$0xf]
        %v1139 = vld [vmem:[%s548 + $0x68] sm:$0xf]
        %v1140 = vld [vmem:[%s548 + $0x6c] sm:$0xf]
        %v1141 = vld [vmem:[%s548 + $0x70] sm:$0xf]
        %v1142 = vld [vmem:[%s548 + $0x74] sm:$0xf]
        %v1143 = vld [vmem:[%s548 + $0x78] sm:$0xf]
        %v1144 = vld [vmem:[%s548 + $0x7c] sm:$0xf]
        %v1177 = vunpack.c.l.b16 %v1113
        %v1178 = vunpack.c.l.b16 %v1114
        %v1179 = vunpack.c.l.b16 %v1115
        %v1180 = vunpack.c.l.b16 %v1116
        %v1181 = vunpack.c.l.b16 %v1117
        %v1182 = vunpack.c.l.b16 %v1118
        %v1183 = vunpack.c.l.b16 %v1119
        %v1184 = vunpack.c.l.b16 %v1120
        %v1185 = vunpack.c.l.b16 %v1121
        %v1186 = vunpack.c.l.b16 %v1122
        %v1187 = vunpack.c.l.b16 %v1123
        %v1188 = vunpack.c.l.b16 %v1124
        %v1189 = vunpack.c.l.b16 %v1125
        %v1190 = vunpack.c.l.b16 %v1126
        %v1191 = vunpack.c.l.b16 %v1127
        %v1192 = vunpack.c.l.b16 %v1128
        %v1193 = vunpack.c.l.b16 %v1129
        %v1194 = vunpack.c.l.b16 %v1130
        %v1195 = vunpack.c.l.b16 %v1131
        %v1196 = vunpack.c.l.b16 %v1132
        %v1197 = vunpack.c.l.b16 %v1133
        %v1198 = vunpack.c.l.b16 %v1134
        %v1199 = vunpack.c.l.b16 %v1135
        %v1200 = vunpack.c.l.b16 %v1136
        %v1201 = vunpack.c.l.b16 %v1137
        %v1202 = vunpack.c.l.b16 %v1138
        %v1203 = vunpack.c.l.b16 %v1139
        %v1204 = vunpack.c.l.b16 %v1140
        %v1205 = vunpack.c.l.b16 %v1141
        %v1206 = vunpack.c.l.b16 %v1142
        %v1207 = vunpack.c.l.b16 %v1143
        %v1208 = vunpack.c.l.b16 %v1144
        %v1209 = vpack.c.b16 %v1178, %v1177
        %v1210 = vpack.c.b16 %v1180, %v1179
        %v1211 = vpack.c.b16 %v1182, %v1181
        %v1212 = vpack.c.b16 %v1184, %v1183
        %v1213 = vpack.c.b16 %v1186, %v1185
        %v1214 = vpack.c.b16 %v1188, %v1187
        %v1215 = vpack.c.b16 %v1190, %v1189
        %v1216 = vpack.c.b16 %v1192, %v1191
        %v1217 = vpack.c.b16 %v1194, %v1193
        %v1218 = vpack.c.b16 %v1196, %v1195
        %v1219 = vpack.c.b16 %v1198, %v1197
        %v1220 = vpack.c.b16 %v1200, %v1199
        %v1221 = vpack.c.b16 %v1202, %v1201
        %v1222 = vpack.c.b16 %v1204, %v1203
        %v1223 = vpack.c.b16 %v1206, %v1205
        %v1224 = vpack.c.b16 %v1208, %v1207
        %1241 = vmatprep.subr.bf16.mxu0 0
        %1242 = vmatpush1.bf16.msra.mxu0 %v1216
        %1243 = vmatprep.subr.bf16.mxu0 0
        %1244 = vmatpush1.bf16.msra.mxu0 %v1215
        %1245 = vmatprep.subr.bf16.mxu0 0
        %1246 = vmatpush1.bf16.msra.mxu0 %v1214
        %1247 = vmatprep.subr.bf16.mxu0 0
        %1248 = vmatpush1.bf16.msra.mxu0 %v1213
        %1249 = vmatprep.subr.bf16.mxu0 0
        %1250 = vmatpush1.bf16.msra.mxu0 %v1212
        %1251 = vmatprep.subr.bf16.mxu0 0
        %1252 = vmatpush1.bf16.msra.mxu0 %v1211
        %1253 = vmatprep.subr.bf16.mxu0 0
        %1254 = vmatpush1.bf16.msra.mxu0 %v1210
        %1255 = vmatprep.subr.bf16.mxu0 0
        %1256 = vmatpush1.bf16.msra.mxu0 %v1209
        %1257 = vmatprep.subr.bf16.mxu0 0
        %1258 = vmatpush2.bf16.msra.mxu0 %v1224
        %1259 = vmatprep.subr.bf16.mxu0 0
        %1260 = vmatpush2.bf16.msra.mxu0 %v1223
        %1261 = vmatprep.subr.bf16.mxu0 0
        %1262 = vmatpush2.bf16.msra.mxu0 %v1222
        %1263 = vmatprep.subr.bf16.mxu0 0
        %1264 = vmatpush2.bf16.msra.mxu0 %v1221
        %1265 = vmatprep.subr.bf16.mxu0 0
        %1266 = vmatpush2.bf16.msra.mxu0 %v1220
        %1267 = vmatprep.subr.bf16.mxu0 0
        %1268 = vmatpush2.bf16.msra.mxu0 %v1219
        %1269 = vmatprep.subr.bf16.mxu0 0
        %1270 = vmatpush2.bf16.msra.mxu0 %v1218
        %1271 = vmatprep.subr.bf16.mxu0 0
        %1272 = vmatpush2.bf16.msra.mxu0 %v1217
        %1273 = vmatprep.mubr.bf16.mxu0 %v1110
        %1274 = vmatmul.mubr.bf16.gmra.mxu0 %v998
        %v1275 = vpop.f32.mrf.mxu0
        %v1276 = vadd.f32 0.0, %v1275
        %v1277 = vpop.f32.mrf.mxu0
        %v1278 = vpop.f32.mrf.mxu0
        %v1279 = vadd.f32 0.0, %v1278
        %v1280 = vpop.f32.mrf.mxu0
        %1281 = vdwg.mxu0
        %v1282 = vadd.f32 %v1111, %v1276
        %v1283 = vadd.f32 %v1112, %v1279
        %1284 = vst.msk [vmem:[#allocation2] sm:$0xff] %vm753, %v1282
        %1285 = vst.msk [vmem:[#allocation2 + $0x8] sm:$0xff] %vm753, %v1283
        %p1286 = scmp.eq.s32.totalorder %s38, 1
        // Predicated region
        $region85: #{tpu_custom_call.1} parent=71 // pred_check
          %p1287 = pneg %p1286
        $region86: #{tpu_custom_call.1} parent=71 // pred_check_branch
          %1289 = sbr.rel (%p1287) target = $region88
        $region87: #{tpu_custom_call.1} parent=71 // pred_region
          %v1290 = vld [vmem:[%s472] sm:$0xff]
          %v1291 = vld [vmem:[%s472 + $0x8] sm:$0xff]
          %v1292 = vld [vmem:[#allocation2] sm:$0xff]
          %v1293 = vld [vmem:[#allocation2 + $0x8] sm:$0xff]
          %v1294 = vld [vmem:[%s4] sm:$0x1]
          %v1296 = vlaneseq
          %v1297 = vshrl.u32 %v1296, 7
          %v1298 = vsub.s32 0, %v1297
          %v1299 = vrot.slane %v1294, %v1298
          %v1301 = vadd.f32 %v1292, %v1299
          %v1302 = vadd.f32 %v1293, %v1299
          %v1303 = vadd.f32 %v1290, %v1301
          %v1304 = vadd.f32 %v1291, %v1302
          %v1305 = vld [vmem:[%s5] sm:$0x1]
          %v1306 = vld [vmem:[%s6] sm:$0x1]
          %v1307 = vsel %vm753, %v1303, 0.0
          %1308 = vadd.xlane.f32.xlu0 %v1307
          %v1309 = vpop.xlane.xlu0 %1308
          %v1310 = vsel %vm753, %v1304, 0.0
          %1311 = vadd.xlane.f32.xlu0 %v1310
          %v1312 = vpop.xlane.xlu0 %1311
          %v1313 = vrcp.pop 64.0
          %v1314 = vmul.f32 %v1309, %v1313
          %v1315 = vmul.f32 %v1312, %v1313
          %v1316 = vsub.f32 %v1303, %v1314
          %v1317 = vsub.f32 %v1304, %v1315
          %v1318 = vmul.f32 %v1316, %v1316
          %v1319 = vmul.f32 %v1317, %v1317
          %v1320 = vsel %vm753, %v1318, 0.0
          %1321 = vadd.xlane.f32.xlu0 %v1320
          %v1322 = vpop.xlane.xlu0 %1321
          %v1323 = vsel %vm753, %v1319, 0.0
          %1324 = vadd.xlane.f32.xlu0 %v1323
          %v1325 = vpop.xlane.xlu0 %1324
          %v1326 = vmul.f32 %v1322, %v1313
          %v1327 = vmul.f32 %v1325, %v1313
          %v1328 = vadd.f32 %v1326, 1e-05
          %v1329 = vadd.f32 %v1327, 1e-05
          %v1330 = vrsqrt.pop %v1328
          %v1331 = vrsqrt.pop %v1329
          %v1332 = vmul.f32 %v1316, %v1330
          %v1333 = vmul.f32 %v1317, %v1331
          %v1335 = vlaneseq
          %v1336 = vshrl.u32 %v1335, 7
          %v1337 = vsub.s32 0, %v1336
          %v1338 = vrot.slane %v1305, %v1337
          %v1340 = vmul.f32 %v1332, %v1338
          %v1341 = vmul.f32 %v1333, %v1338
          %v1343 = vlaneseq
          %v1344 = vshrl.u32 %v1343, 7
          %v1345 = vsub.s32 0, %v1344
          %v1346 = vrot.slane %v1306, %v1345
          %v1348 = vadd.f32 %v1340, %v1346
          %v1349 = vadd.f32 %v1341, %v1346
          %v1350 = vpack.c.bf16 %v1349, %v1348
          %1351 = vst.msk [vmem:[#allocation2] sm:$0xff] %vm753, 0.0
          %1352 = vst.msk [vmem:[#allocation2 + $0x8] sm:$0xff] %vm753, 0.0
          %v1353 = vld [vmem:[%s7] sm:$0xf]
          %v1354 = vld [vmem:[%s7 + $0x4] sm:$0xf]
          %v1355 = vld [vmem:[%s7 + $0x8] sm:$0xf]
          %v1356 = vld [vmem:[%s7 + $0xc] sm:$0xf]
          %v1357 = vld [vmem:[%s7 + $0x10] sm:$0xf]
          %v1358 = vld [vmem:[%s7 + $0x14] sm:$0xf]
          %v1359 = vld [vmem:[%s7 + $0x18] sm:$0xf]
          %v1360 = vld [vmem:[%s7 + $0x1c] sm:$0xf]
          %v1361 = vld [vmem:[%s8] sm:$0x1]
          %v1363 = vlaneseq
          %v1364 = vshrl.u32 %v1363, 7
          %v1365 = vsub.s32 0, %v1364
          %v1366 = vrot.slane %v1361, %v1365
          %v1376 = vunpack.c.l.b16 %v1353
          %v1377 = vunpack.c.l.b16 %v1354
          %v1378 = vunpack.c.l.b16 %v1355
          %v1379 = vunpack.c.l.b16 %v1356
          %v1380 = vunpack.c.l.b16 %v1357
          %v1381 = vunpack.c.l.b16 %v1358
          %v1382 = vunpack.c.l.b16 %v1359
          %v1383 = vunpack.c.l.b16 %v1360
          %v1384 = vpack.c.b16 %v1377, %v1376
          %v1385 = vpack.c.b16 %v1379, %v1378
          %v1386 = vpack.c.b16 %v1381, %v1380
          %v1387 = vpack.c.b16 %v1383, %v1382
          %v1393 = vsel %vm753, %v1350, 0
          %1395 = vmatprep.subr.bf16.mxu0 0
          %1396 = vmatpush1.bf16.msra.mxu0 0
          %1397 = vmatprep.subr.bf16.mxu0 0
          %1398 = vmatpush1.bf16.msra.mxu0 0
          %1399 = vmatprep.subr.bf16.mxu0 0
          %1400 = vmatpush1.bf16.msra.mxu0 0
          %1401 = vmatprep.subr.bf16.mxu0 0
          %1402 = vmatpush1.bf16.msra.mxu0 0
          %1403 = vmatprep.subr.bf16.mxu0 0
          %1404 = vmatpush1.bf16.msra.mxu0 %v1387
          %1405 = vmatprep.subr.bf16.mxu0 0
          %1406 = vmatpush1.bf16.msra.mxu0 %v1386
          %1407 = vmatprep.subr.bf16.mxu0 0
          %1408 = vmatpush1.bf16.msra.mxu0 %v1385
          %1409 = vmatprep.subr.bf16.mxu0 0
          %1410 = vmatpush1.bf16.msra.mxu0 %v1384
          %1411 = vmatprep.subr.bf16.mxu0 0
          %1412 = vmatpush2.bf16.msra.mxu0 0
          %1413 = vmatprep.subr.bf16.mxu0 0
          %1414 = vmatpush2.bf16.msra.mxu0 0
          %1415 = vmatprep.subr.bf16.mxu0 0
          %1416 = vmatpush2.bf16.msra.mxu0 0
          %1417 = vmatprep.subr.bf16.mxu0 0
          %1418 = vmatpush2.bf16.msra.mxu0 0
          %1419 = vmatprep.subr.bf16.mxu0 0
          %1420 = vmatpush2.bf16.msra.mxu0 0
          %1421 = vmatprep.subr.bf16.mxu0 0
          %1422 = vmatpush2.bf16.msra.mxu0 0
          %1423 = vmatprep.subr.bf16.mxu0 0
          %1424 = vmatpush2.bf16.msra.mxu0 0
          %1425 = vmatprep.subr.bf16.mxu0 0
          %1426 = vmatpush2.bf16.msra.mxu0 0
          %1427 = vmatprep.mubr.bf16.mxu0 0
          %1428 = vmatmul.mubr.bf16.gmra.mxu0 %v1393
          %v1429 = vpop.f32.mrf.mxu0
          %v1430 = vadd.f32 %v1366, %v1429
          %v1431 = vpop.f32.mrf.mxu0
          %v1432 = vpop.f32.mrf.mxu0
          %v1433 = vadd.f32 %v1366, %v1432
          %v1434 = vpop.f32.mrf.mxu0
          %1435 = vdwg.mxu0
          %v1436 = vmax.f32 %v1430, 0.0
          %v1437 = vmax.f32 %v1433, 0.0
          %v1438 = vpack.c.bf16 %v1437, %v1436
          %v1439 = vld [vmem:[#allocation2] sm:$0xff]
          %v1440 = vld [vmem:[#allocation2 + $0x8] sm:$0xff]
          %v1441 = vld [vmem:[%s9] sm:$0xf]
          %v1442 = vld [vmem:[%s9 + $0x4] sm:$0xf]
          %v1443 = vld [vmem:[%s9 + $0x8] sm:$0xf]
          %v1444 = vld [vmem:[%s9 + $0xc] sm:$0xf]
          %v1445 = vld [vmem:[%s9 + $0x10] sm:$0xf]
          %v1446 = vld [vmem:[%s9 + $0x14] sm:$0xf]
          %v1447 = vld [vmem:[%s9 + $0x18] sm:$0xf]
          %v1448 = vld [vmem:[%s9 + $0x1c] sm:$0xf]
          %v1449 = vld [vmem:[%s9 + $0x20] sm:$0xf]
          %v1450 = vld [vmem:[%s9 + $0x24] sm:$0xf]
          %v1451 = vld [vmem:[%s9 + $0x28] sm:$0xf]
          %v1452 = vld [vmem:[%s9 + $0x2c] sm:$0xf]
          %v1453 = vld [vmem:[%s9 + $0x30] sm:$0xf]
          %v1454 = vld [vmem:[%s9 + $0x34] sm:$0xf]
          %v1455 = vld [vmem:[%s9 + $0x38] sm:$0xf]
          %v1456 = vld [vmem:[%s9 + $0x3c] sm:$0xf]
          %v1473 = vunpack.c.l.b16 %v1441
          %v1474 = vunpack.c.l.b16 %v1442
          %v1475 = vunpack.c.l.b16 %v1443
          %v1476 = vunpack.c.l.b16 %v1444
          %v1477 = vunpack.c.l.b16 %v1445
          %v1478 = vunpack.c.l.b16 %v1446
          %v1479 = vunpack.c.l.b16 %v1447
          %v1480 = vunpack.c.l.b16 %v1448
          %v1481 = vunpack.c.l.b16 %v1449
          %v1482 = vunpack.c.l.b16 %v1450
          %v1483 = vunpack.c.l.b16 %v1451
          %v1484 = vunpack.c.l.b16 %v1452
          %v1485 = vunpack.c.l.b16 %v1453
          %v1486 = vunpack.c.l.b16 %v1454
          %v1487 = vunpack.c.l.b16 %v1455
          %v1488 = vunpack.c.l.b16 %v1456
          %v1489 = vpack.c.b16 %v1474, %v1473
          %v1490 = vpack.c.b16 %v1476, %v1475
          %v1491 = vpack.c.b16 %v1478, %v1477
          %v1492 = vpack.c.b16 %v1480, %v1479
          %v1493 = vpack.c.b16 %v1482, %v1481
          %v1494 = vpack.c.b16 %v1484, %v1483
          %v1495 = vpack.c.b16 %v1486, %v1485
          %v1496 = vpack.c.b16 %v1488, %v1487
          %1505 = vmatprep.subr.bf16.mxu0 0
          %1506 = vmatpush1.bf16.msra.mxu0 %v1496
          %1507 = vmatprep.subr.bf16.mxu0 0
          %1508 = vmatpush1.bf16.msra.mxu0 %v1495
          %1509 = vmatprep.subr.bf16.mxu0 0
          %1510 = vmatpush1.bf16.msra.mxu0 %v1494
          %1511 = vmatprep.subr.bf16.mxu0 0
          %1512 = vmatpush1.bf16.msra.mxu0 %v1493
          %1513 = vmatprep.subr.bf16.mxu0 0
          %1514 = vmatpush1.bf16.msra.mxu0 %v1492
          %1515 = vmatprep.subr.bf16.mxu0 0
          %1516 = vmatpush1.bf16.msra.mxu0 %v1491
          %1517 = vmatprep.subr.bf16.mxu0 0
          %1518 = vmatpush1.bf16.msra.mxu0 %v1490
          %1519 = vmatprep.subr.bf16.mxu0 0
          %1520 = vmatpush1.bf16.msra.mxu0 %v1489
          %1521 = vmatprep.subr.bf16.mxu0 0
          %1522 = vmatpush2.bf16.msra.mxu0 0
          %1523 = vmatprep.subr.bf16.mxu0 0
          %1524 = vmatpush2.bf16.msra.mxu0 0
          %1525 = vmatprep.subr.bf16.mxu0 0
          %1526 = vmatpush2.bf16.msra.mxu0 0
          %1527 = vmatprep.subr.bf16.mxu0 0
          %1528 = vmatpush2.bf16.msra.mxu0 0
          %1529 = vmatprep.subr.bf16.mxu0 0
          %1530 = vmatpush2.bf16.msra.mxu0 0
          %1531 = vmatprep.subr.bf16.mxu0 0
          %1532 = vmatpush2.bf16.msra.mxu0 0
          %1533 = vmatprep.subr.bf16.mxu0 0
          %1534 = vmatpush2.bf16.msra.mxu0 0
          %1535 = vmatprep.subr.bf16.mxu0 0
          %1536 = vmatpush2.bf16.msra.mxu0 0
          %1537 = vmatprep.mubr.bf16.mxu0 0
          %1538 = vmatmul.mubr.bf16.gmra.mxu0 %v1438
          %v1539 = vpop.f32.mrf.mxu0
          %v1540 = vadd.f32 0.0, %v1539
          %v1541 = vpop.f32.mrf.mxu0
          %v1542 = vpop.f32.mrf.mxu0
          %v1543 = vadd.f32 0.0, %v1542
          %v1544 = vpop.f32.mrf.mxu0
          %1545 = vdwg.mxu0
          %v1546 = vadd.f32 %v1439, %v1540
          %v1547 = vadd.f32 %v1440, %v1543
          %1548 = vst.msk [vmem:[#allocation2] sm:$0xff] %vm753, %v1546
          %1549 = vst.msk [vmem:[#allocation2 + $0x8] sm:$0xff] %vm753, %v1547
          %s1550 = scalar_lea.vmem %s7, 32
          %v1551 = vld [vmem:[%s1550] sm:$0xf]
          %v1552 = vld [vmem:[%s1550 + $0x4] sm:$0xf]
          %v1553 = vld [vmem:[%s1550 + $0x8] sm:$0xf]
          %v1554 = vld [vmem:[%s1550 + $0xc] sm:$0xf]
          %v1555 = vld [vmem:[%s1550 + $0x10] sm:$0xf]
          %v1556 = vld [vmem:[%s1550 + $0x14] sm:$0xf]
          %v1557 = vld [vmem:[%s1550 + $0x18] sm:$0xf]
          %v1558 = vld [vmem:[%s1550 + $0x1c] sm:$0xf]
          %s1559 = scalar_lea.vmem %s8, 1
          %v1560 = vld [vmem:[%s1559] sm:$0x1]
          %v1562 = vlaneseq
          %v1563 = vshrl.u32 %v1562, 7
          %v1564 = vsub.s32 0, %v1563
          %v1565 = vrot.slane %v1560, %v1564
          %v1575 = vunpack.c.l.b16 %v1551
          %v1576 = vunpack.c.l.b16 %v1552
          %v1577 = vunpack.c.l.b16 %v1553
          %v1578 = vunpack.c.l.b16 %v1554
          %v1579 = vunpack.c.l.b16 %v1555
          %v1580 = vunpack.c.l.b16 %v1556
          %v1581 = vunpack.c.l.b16 %v1557
          %v1582 = vunpack.c.l.b16 %v1558
          %v1583 = vpack.c.b16 %v1576, %v1575
          %v1584 = vpack.c.b16 %v1578, %v1577
          %v1585 = vpack.c.b16 %v1580, %v1579
          %v1586 = vpack.c.b16 %v1582, %v1581
          %1591 = vmatprep.subr.bf16.mxu0 0
          %1592 = vmatpush1.bf16.msra.mxu0 0
          %1593 = vmatprep.subr.bf16.mxu0 0
          %1594 = vmatpush1.bf16.msra.mxu0 0
          %1595 = vmatprep.subr.bf16.mxu0 0
          %1596 = vmatpush1.bf16.msra.mxu0 0
          %1597 = vmatprep.subr.bf16.mxu0 0
          %1598 = vmatpush1.bf16.msra.mxu0 0
          %1599 = vmatprep.subr.bf16.mxu0 0
          %1600 = vmatpush1.bf16.msra.mxu0 %v1586
          %1601 = vmatprep.subr.bf16.mxu0 0
          %1602 = vmatpush1.bf16.msra.mxu0 %v1585
          %1603 = vmatprep.subr.bf16.mxu0 0
          %1604 = vmatpush1.bf16.msra.mxu0 %v1584
          %1605 = vmatprep.subr.bf16.mxu0 0
          %1606 = vmatpush1.bf16.msra.mxu0 %v1583
          %1607 = vmatprep.subr.bf16.mxu0 0
          %1608 = vmatpush2.bf16.msra.mxu0 0
          %1609 = vmatprep.subr.bf16.mxu0 0
          %1610 = vmatpush2.bf16.msra.mxu0 0
          %1611 = vmatprep.subr.bf16.mxu0 0
          %1612 = vmatpush2.bf16.msra.mxu0 0
          %1613 = vmatprep.subr.bf16.mxu0 0
          %1614 = vmatpush2.bf16.msra.mxu0 0
          %1615 = vmatprep.subr.bf16.mxu0 0
          %1616 = vmatpush2.bf16.msra.mxu0 0
          %1617 = vmatprep.subr.bf16.mxu0 0
          %1618 = vmatpush2.bf16.msra.mxu0 0
          %1619 = vmatprep.subr.bf16.mxu0 0
          %1620 = vmatpush2.bf16.msra.mxu0 0
          %1621 = vmatprep.subr.bf16.mxu0 0
          %1622 = vmatpush2.bf16.msra.mxu0 0
          %1623 = vmatprep.mubr.bf16.mxu0 0
          %1624 = vmatmul.mubr.bf16.gmra.mxu0 %v1393
          %v1625 = vpop.f32.mrf.mxu0
          %v1626 = vadd.f32 %v1565, %v1625
          %v1627 = vpop.f32.mrf.mxu0
          %v1628 = vpop.f32.mrf.mxu0
          %v1629 = vadd.f32 %v1565, %v1628
          %v1630 = vpop.f32.mrf.mxu0
          %1631 = vdwg.mxu0
          %v1632 = vmax.f32 %v1626, 0.0
          %v1633 = vmax.f32 %v1629, 0.0
          %v1634 = vpack.c.bf16 %v1633, %v1632
          %v1635 = vld [vmem:[#allocation2] sm:$0xff]
          %v1636 = vld [vmem:[#allocation2 + $0x8] sm:$0xff]
          %s1637 = scalar_lea.vmem %s9, 64
          %v1638 = vld [vmem:[%s1637] sm:$0xf]
          %v1639 = vld [vmem:[%s1637 + $0x4] sm:$0xf]
          %v1640 = vld [vmem:[%s1637 + $0x8] sm:$0xf]
          %v1641 = vld [vmem:[%s1637 + $0xc] sm:$0xf]
          %v1642 = vld [vmem:[%s1637 + $0x10] sm:$0xf]
          %v1643 = vld [vmem:[%s1637 + $0x14] sm:$0xf]
          %v1644 = vld [vmem:[%s1637 + $0x18] sm:$0xf]
          %v1645 = vld [vmem:[%s1637 + $0x1c] sm:$0xf]
          %v1646 = vld [vmem:[%s1637 + $0x20] sm:$0xf]
          %v1647 = vld [vmem:[%s1637 + $0x24] sm:$0xf]
          %v1648 = vld [vmem:[%s1637 + $0x28] sm:$0xf]
          %v1649 = vld [vmem:[%s1637 + $0x2c] sm:$0xf]
          %v1650 = vld [vmem:[%s1637 + $0x30] sm:$0xf]
          %v1651 = vld [vmem:[%s1637 + $0x34] sm:$0xf]
          %v1652 = vld [vmem:[%s1637 + $0x38] sm:$0xf]
          %v1653 = vld [vmem:[%s1637 + $0x3c] sm:$0xf]
          %v1670 = vunpack.c.l.b16 %v1638
          %v1671 = vunpack.c.l.b16 %v1639
          %v1672 = vunpack.c.l.b16 %v1640
          %v1673 = vunpack.c.l.b16 %v1641
          %v1674 = vunpack.c.l.b16 %v1642
          %v1675 = vunpack.c.l.b16 %v1643
          %v1676 = vunpack.c.l.b16 %v1644
          %v1677 = vunpack.c.l.b16 %v1645
          %v1678 = vunpack.c.l.b16 %v1646
          %v1679 = vunpack.c.l.b16 %v1647
          %v1680 = vunpack.c.l.b16 %v1648
          %v1681 = vunpack.c.l.b16 %v1649
          %v1682 = vunpack.c.l.b16 %v1650
          %v1683 = vunpack.c.l.b16 %v1651
          %v1684 = vunpack.c.l.b16 %v1652
          %v1685 = vunpack.c.l.b16 %v1653
          %v1686 = vpack.c.b16 %v1671, %v1670
          %v1687 = vpack.c.b16 %v1673, %v1672
          %v1688 = vpack.c.b16 %v1675, %v1674
          %v1689 = vpack.c.b16 %v1677, %v1676
          %v1690 = vpack.c.b16 %v1679, %v1678
          %v1691 = vpack.c.b16 %v1681, %v1680
          %v1692 = vpack.c.b16 %v1683, %v1682
          %v1693 = vpack.c.b16 %v1685, %v1684
          %1702 = vmatprep.subr.bf16.mxu0 0
          %1703 = vmatpush1.bf16.msra.mxu0 %v1693
          %1704 = vmatprep.subr.bf16.mxu0 0
          %1705 = vmatpush1.bf16.msra.mxu0 %v1692
          %1706 = vmatprep.subr.bf16.mxu0 0
          %1707 = vmatpush1.bf16.msra.mxu0 %v1691
          %1708 = vmatprep.subr.bf16.mxu0 0
          %1709 = vmatpush1.bf16.msra.mxu0 %v1690
          %1710 = vmatprep.subr.bf16.mxu0 0
          %1711 = vmatpush1.bf16.msra.mxu0 %v1689
          %1712 = vmatprep.subr.bf16.mxu0 0
          %1713 = vmatpush1.bf16.msra.mxu0 %v1688
          %1714 = vmatprep.subr.bf16.mxu0 0
          %1715 = vmatpush1.bf16.msra.mxu0 %v1687
          %1716 = vmatprep.subr.bf16.mxu0 0
          %1717 = vmatpush1.bf16.msra.mxu0 %v1686
          %1718 = vmatprep.subr.bf16.mxu0 0
          %1719 = vmatpush2.bf16.msra.mxu0 0
          %1720 = vmatprep.subr.bf16.mxu0 0
          %1721 = vmatpush2.bf16.msra.mxu0 0
          %1722 = vmatprep.subr.bf16.mxu0 0
          %1723 = vmatpush2.bf16.msra.mxu0 0
          %1724 = vmatprep.subr.bf16.mxu0 0
          %1725 = vmatpush2.bf16.msra.mxu0 0
          %1726 = vmatprep.subr.bf16.mxu0 0
          %1727 = vmatpush2.bf16.msra.mxu0 0
          %1728 = vmatprep.subr.bf16.mxu0 0
          %1729 = vmatpush2.bf16.msra.mxu0 0
          %1730 = vmatprep.subr.bf16.mxu0 0
          %1731 = vmatpush2.bf16.msra.mxu0 0
          %1732 = vmatprep.subr.bf16.mxu0 0
          %1733 = vmatpush2.bf16.msra.mxu0 0
          %1734 = vmatprep.mubr.bf16.mxu0 0
          %1735 = vmatmul.mubr.bf16.gmra.mxu0 %v1634
          %v1736 = vpop.f32.mrf.mxu0
          %v1737 = vadd.f32 0.0, %v1736
          %v1738 = vpop.f32.mrf.mxu0
          %v1739 = vpop.f32.mrf.mxu0
          %v1740 = vadd.f32 0.0, %v1739
          %v1741 = vpop.f32.mrf.mxu0
          %1742 = vdwg.mxu0
          %v1743 = vadd.f32 %v1635, %v1737
          %v1744 = vadd.f32 %v1636, %v1740
          %1745 = vst.msk [vmem:[#allocation2] sm:$0xff] %vm753, %v1743
          %1746 = vst.msk [vmem:[#allocation2 + $0x8] sm:$0xff] %vm753, %v1744
          %v1747 = vld [vmem:[#allocation2] sm:$0xff]
          %v1748 = vld [vmem:[#allocation2 + $0x8] sm:$0xff]
          %v1749 = vld [vmem:[%s10] sm:$0x1]
          %v1751 = vlaneseq
          %v1752 = vshrl.u32 %v1751, 7
          %v1753 = vsub.s32 0, %v1752
          %v1754 = vrot.slane %v1749, %v1753
          %v1756 = vadd.f32 %v1747, %v1754
          %v1757 = vadd.f32 %v1748, %v1754
          %v1758 = vadd.f32 %v1348, %v1756
          %v1759 = vadd.f32 %v1349, %v1757
          %v1760 = vld [vmem:[%s11] sm:$0x1]
          %v1761 = vld [vmem:[%s12] sm:$0x1]
          %v1762 = vsel %vm753, %v1758, 0.0
          %1763 = vadd.xlane.f32.xlu0 %v1762
          %v1764 = vpop.xlane.xlu0 %1763
          %v1765 = vsel %vm753, %v1759, 0.0
          %1766 = vadd.xlane.f32.xlu0 %v1765
          %v1767 = vpop.xlane.xlu0 %1766
          %v1768 = vmul.f32 %v1764, %v1313
          %v1769 = vmul.f32 %v1767, %v1313
          %v1770 = vsub.f32 %v1758, %v1768
          %v1771 = vsub.f32 %v1759, %v1769
          %v1772 = vmul.f32 %v1770, %v1770
          %v1773 = vmul.f32 %v1771, %v1771
          %v1774 = vsel %vm753, %v1772, 0.0
          %1775 = vadd.xlane.f32.xlu0 %v1774
          %v1776 = vpop.xlane.xlu0 %1775
          %v1777 = vsel %vm753, %v1773, 0.0
          %1778 = vadd.xlane.f32.xlu0 %v1777
          %v1779 = vpop.xlane.xlu0 %1778
          %v1780 = vmul.f32 %v1776, %v1313
          %v1781 = vmul.f32 %v1779, %v1313
          %v1782 = vadd.f32 %v1780, 1e-05
          %v1783 = vadd.f32 %v1781, 1e-05
          %v1784 = vrsqrt.pop %v1782
          %v1785 = vrsqrt.pop %v1783
          %v1786 = vmul.f32 %v1770, %v1784
          %v1787 = vmul.f32 %v1771, %v1785
          %v1789 = vlaneseq
          %v1790 = vshrl.u32 %v1789, 7
          %v1791 = vsub.s32 0, %v1790
          %v1792 = vrot.slane %v1760, %v1791
          %v1794 = vmul.f32 %v1786, %v1792
          %v1795 = vmul.f32 %v1787, %v1792
          %v1797 = vlaneseq
          %v1798 = vshrl.u32 %v1797, 7
          %v1799 = vsub.s32 0, %v1798
          %v1800 = vrot.slane %v1761, %v1799
          %v1802 = vadd.f32 %v1794, %v1800
          %v1803 = vadd.f32 %v1795, %v1800
          %1804 = vst.msk [vmem:[%s538] sm:$0xff] %vm753, %v1802
          %1805 = vst.msk [vmem:[%s538 + $0x8] sm:$0xff] %vm753, %v1803
        $region88: #{tpu_custom_call.1} parent=71 // pred_fallthru
          _
        %s1806 = sand.u32 %s346, 1
        %s1807 = scalar_lea.sflag [#allocation6], %s1806
        %s1808 = sand.u32 %s346, 1
        %s1809 = smul.addr %s1808, 16
        %s1810 = scalar_lea.vmem [#allocation9], %s1809
        // Predicated region
        $region89: #{tpu_custom_call.1} parent=71 // pred_check
          %p1811 = pneg %p356
        $region90: #{tpu_custom_call.1} parent=71 // pred_check_branch
          %1813 = sbr.rel (%p1811) target = $region92
        $region91: #{tpu_custom_call.1} parent=71 // pred_region
          %s1815 = ssub.s32 256, 256
          %1816 = vsyncadd %s1807, %s1815
          %s1817 = smul.addr %s37, 2
          %s1818 = smul.addr %s1817, 128
          %s1819 = scalar_lea.hbm %s13, %s1818
          %s1820 = sshll.u32 %s1810, 4
          %s1821 = int_to_ptr.vmem [resolvable:$true] %s1820
          %1826 = dma.vmem_to_hbm [thread:$0]  %s1821, 256, %s1819, %s1807, 128, 128, 8
        $region92: #{tpu_custom_call.1} parent=71 // pred_fallthru
          _
      $region72: #{tpu_custom_call.1} parent=5 // pred_fallthru
        _
      %p1827 = scmp.le.s32.totalorder 2, %s28
      // Predicated region
      $region93: #{tpu_custom_call.1} parent=5 // pred_check
        %p1828 = pneg %p1827
      $region94: #{tpu_custom_call.1} parent=5 // pred_check_branch
        %1830 = sbr.rel (%p1828) target = $region96
      $region95: #{tpu_custom_call.1} parent=5 // pred_region
        %s1831 = ssub.s32 %s28, 2
        // Predicated region
        $region97: #{tpu_custom_call.1} parent=95 // pred_check
          %p1832 = pneg %p362
        $region98: #{tpu_custom_call.1} parent=95 // pred_check_branch
          %1834 = sbr.rel (%p1832) target = $region100
        $region99: #{tpu_custom_call.1} parent=95 // pred_region
          %s1835 = sand.u32 %s347, 1
          %s1836 = scalar_lea.sflag [#allocation6], %s1835
          %s1837 = sand.u32 %s347, 1
          %s1838 = smul.addr %s1837, 16
          %s1839 = scalar_lea.vmem [#allocation9], %s1838
          %1840 = dma.done %s1836, 256
        $region100: #{tpu_custom_call.1} parent=95 // pred_fallthru
          _
      $region96: #{tpu_custom_call.1} parent=5 // pred_fallthru
        _
    $region6: #{tpu_custom_call.1} parent=1 // loop_footer
      %s32 = sadd.s32 1, %s28
    $region7: #{tpu_custom_call.1} parent=1 // loop_footer_branch
      %27 = sbr.rel target = $region3
    $region8: #{tpu_custom_call.1} parent=1 // loop_exit
      _
    %1841 = vsyncpa [#allocation5], 1
    %s1842 = scalar_lea.sflag [#allocation5], 1
    %1843 = vsyncpa %s1842, 1
    %1844 = vsyncpa [#allocation8], 1
    %s1845 = scalar_lea.sflag [#allocation8], 1
    %1846 = vsyncpa %s1845, 1
    %1847 = vsyncpa [#allocation6], 1
    %s1848 = scalar_lea.sflag [#allocation6], 1
    %1849 = vsyncpa %s1848, 1

</llo_original>
